<compile_context>
chip_gen: v7x
topology: tpu7x:2x2x1
jax: 0.10.0
libtpu: 0.0.40
codegen_flags: <defaults>
</compile_context>

<pallas_src>
import jax
import jax.numpy as jnp
from jax.experimental import pallas as pl
from jax.experimental.pallas import tpu as pltpu

EPS = 0.0  # GINEConv default eps


def _round_up(v: int, m: int) -> int:
    return (v + m - 1) // m * m


def gine_conv_mlp_kernel(xg_ref, xr_ref, src_ref, dst_ref, ea_ref,
                         w1_ref, b1_ref, w2_ref, b2_ref, w3_ref, b3_ref,
                         out_ref, acc_ref):
    i = pl.program_id(0)                       # node tile (parallel)
    k = pl.program_id(1)                       # edge tile (reduction)
    n_pad = xg_ref.shape[0]
    tn = acc_ref.shape[0]
    te = ea_ref.shape[0]

    @pl.when(k == 0)
    def _init():
        acc_ref[...] = jnp.zeros_like(acc_ref)

    src_col = src_ref[...]                     # [TE, 1] int32 (padded edges = -1)
    dst_row = dst_ref[...]                     # [1, TE] int32 (padded edges = -1)

    # Gather x[src] as a one-hot matmul (bf16 MXU path, f32 accumulation).
    # TODO(synk): for very large graphs, replace this O(E*N) one-hot gather with a
    # scalar-prefetch / DMA row gather and keep the one-hot only for the scatter.
    gather_ids = jax.lax.broadcasted_iota(jnp.int32, (te, n_pad), 1)
    src_oh = (gather_ids == src_col).astype(jnp.bfloat16)             # [TE, N_pad]
    x_j = jnp.dot(src_oh, xg_ref[...], preferred_element_type=jnp.float32)

    # GINE message (f32).
    msg = jnp.maximum(x_j + ea_ref[...], 0.0)                         # [TE, F_pad]

    # Scatter-add by destination: one-hot built pre-transposed as [TN, TE].
    local_ids = i * tn + jax.lax.broadcasted_iota(jnp.int32, (tn, te), 0)
    dst_oh_t = (local_ids == dst_row).astype(jnp.bfloat16)            # [TN, TE]
    acc_ref[...] += jnp.dot(dst_oh_t, msg.astype(jnp.bfloat16),
                            preferred_element_type=jnp.float32)

    @pl.when(k == pl.num_programs(1) - 1)
    def _finish():
        h = acc_ref[...] + (1.0 + EPS) * xr_ref[...]
        h1 = jnp.maximum(
            jnp.dot(h, w1_ref[...], preferred_element_type=jnp.float32)
            + b1_ref[...], 0.0)
        h2 = jnp.maximum(
            jnp.dot(h1, w2_ref[...], preferred_element_type=jnp.float32)
            + b2_ref[...], 0.0)
        y = jnp.dot(h2, w3_ref[...], preferred_element_type=jnp.float32) + b3_ref[...]
        out_ref[...] = y.astype(out_ref.dtype)


def gine_conv_mlp(x, edge_index, edge_attr, params, *, tile_n=256, tile_e=512):
    """x: [N, F_in] f32, edge_index: [2, E] int, edge_attr: [E, F_in] f32."""
    n, f_in = x.shape
    e = edge_index.shape[1]
    w1, b1, w2, b2, w3, b3 = params
    hidden = w1.shape[1]
    out_ch = w3.shape[1]

    # Lane-dense padding of feature / hidden / output dims.
    f_pad = _round_up(f_in, 128)
    h_pad = _round_up(hidden, 128)
    o_pad = _round_up(out_ch, 128)

    # Tile sizes: node tile multiple of 8 (sublanes), edge tile multiple of 128 (lanes).
    tile_n = max(8, (tile_n // 8) * 8)
    tile_n = min(tile_n, _round_up(n, 8))
    n_pad = _round_up(n, tile_n)
    tile_e = max(128, (tile_e // 128) * 128)
    tile_e = min(tile_e, _round_up(e, 128))
    e_pad = _round_up(e, tile_e)

    # Padded operands.  Padded edges use index -1 so they never match any node,
    # and their edge_attr rows are zero, so they contribute nothing.
    xp = jnp.zeros((n_pad, f_pad), jnp.float32).at[:n, :f_in].set(x)
    xg = xp.astype(jnp.bfloat16)               # gather operand (bf16 MXU path)
    eap = jnp.zeros((e_pad, f_pad), jnp.float32).at[:e, :f_in].set(edge_attr)
    src = jnp.full((e_pad, 1), -1, jnp.int32).at[:e, 0].set(
        edge_index[0].astype(jnp.int32))
    dst = jnp.full((1, e_pad), -1, jnp.int32).at[0, :e].set(
        edge_index[1].astype(jnp.int32))
    w1p = jnp.zeros((f_pad, h_pad), jnp.float32).at[:f_in, :hidden].set(w1)
    b1p = jnp.zeros((1, h_pad), jnp.float32).at[0, :hidden].set(b1)
    w2p = jnp.zeros((h_pad, h_pad), jnp.float32).at[:hidden, :hidden].set(w2)
    b2p = jnp.zeros((1, h_pad), jnp.float32).at[0, :hidden].set(b2)
    w3p = jnp.zeros((h_pad, o_pad), jnp.float32).at[:hidden, :out_ch].set(w3)
    b3p = jnp.zeros((1, o_pad), jnp.float32).at[0, :out_ch].set(b3)

    grid = (n_pad // tile_n, e_pad // tile_e)
    const2 = lambda i, k: (0, 0)

    in_specs = [
        pl.BlockSpec((n_pad, f_pad), const2),                # xg: full x (bf16), resident
        pl.BlockSpec((tile_n, f_pad), lambda i, k: (i, 0)),  # x (f32) node tile (residual)
        pl.BlockSpec((tile_e, 1), lambda i, k: (k, 0)),      # src indices (column)
        pl.BlockSpec((1, tile_e), lambda i, k: (0, k)),      # dst indices (row)
        pl.BlockSpec((tile_e, f_pad), lambda i, k: (k, 0)),  # edge_attr tile
        pl.BlockSpec((f_pad, h_pad), const2),                # W1 (resident)
        pl.BlockSpec((1, h_pad), const2),                    # b1
        pl.BlockSpec((h_pad, h_pad), const2),                # W2
        pl.BlockSpec((1, h_pad), const2),                    # b2
        pl.BlockSpec((h_pad, o_pad), const2),                # W3
        pl.BlockSpec((1, o_pad), const2),                    # b3
    ]
    out_specs = pl.BlockSpec((tile_n, o_pad), lambda i, k: (i, 0))

    # Advisory cost estimate (one-hot matmuls dominate).
    n_tiles, _ = grid
    flops = (2 * n_tiles * e_pad * n_pad * f_pad       # gather (recomputed per node tile)
             + 2 * n_pad * e_pad * f_pad               # scatter-add
             + 2 * n_pad * (f_pad * h_pad + h_pad * h_pad + h_pad * o_pad))
    bytes_accessed = 4 * (xp.size + eap.size + src.size + dst.size
                          + w1p.size + w2p.size + w3p.size
                          + b1p.size + b2p.size + b3p.size
                          + n_pad * o_pad) + 2 * xg.size
    cost = pl.CostEstimate(flops=int(flops), transcendentals=0,
                           bytes_accessed=int(bytes_accessed))

    # VMEM budget: double-buffered blocks + scratch + in-kernel temporaries.
    blk_bytes = (
        n_pad * f_pad * 2                      # xg (bf16)
        + tile_n * f_pad * 4                   # x tile
        + tile_e * 4 + tile_e * 4              # src / dst
        + tile_e * f_pad * 4                   # edge_attr tile
        + (f_pad * h_pad + h_pad * h_pad + h_pad * o_pad) * 4
        + (2 * h_pad + o_pad) * 4              # biases
        + tile_n * o_pad * 4)                  # output tile
    tmp_bytes = (tile_e * n_pad * 2 + tile_n * tile_e * 2     # one-hots (bf16)
                 + 2 * tile_e * f_pad * 4                     # x_j, msg
                 + tile_n * (f_pad + 2 * h_pad + o_pad) * 4)  # MLP temporaries
    vmem_bytes = 2 * blk_bytes + tile_n * f_pad * 4 + tmp_bytes
    vmem_limit = min(max(int(vmem_bytes * 1.5) + (2 << 20), 16 << 20), 64 << 20)

    out_pad = pl.pallas_call(
        gine_conv_mlp_kernel,
        out_shape=jax.ShapeDtypeStruct((n_pad, o_pad), jnp.float32),
        grid_spec=pltpu.PrefetchScalarGridSpec(
            num_scalar_prefetch=0,
            grid=grid,
            in_specs=in_specs,
            out_specs=out_specs,
            scratch_shapes=[pltpu.VMEM((tile_n, f_pad), jnp.float32)]),
        compiler_params=pltpu.CompilerParams(
            dimension_semantics=("parallel", "arbitrary"),
            vmem_limit_bytes=vmem_limit),
        cost_estimate=cost,
    )(xg, xp, src, dst, eap, w1p, b1p, w2p, b2p, w3p, b3p)

    return out_pad[:n, :out_ch]


def init_linear(key, fan_in, fan_out):
    # torch.nn.Linear-style uniform(+/- 1/sqrt(fan_in)) init, stored as [in, out].
    kw, kb = jax.random.split(key)
    bound = 1.0 / (fan_in ** 0.5)
    w = jax.random.uniform(kw, (fan_in, fan_out), jnp.float32, -bound, bound)
    b = jax.random.uniform(kb, (fan_out,), jnp.float32, -bound, bound)
    return w, b


def reference(x, edge_index, edge_attr, params, *, bf16_inputs=False):
    # Pure-JAX reference.  bf16_inputs=True mirrors the kernel's bf16 rounding of the
    # gather/scatter matmul operands (accumulation stays f32 in both).
    w1, b1, w2, b2, w3, b3 = params
    src, dst = edge_index[0], edge_index[1]
    xs = x.astype(jnp.bfloat16).astype(jnp.float32) if bf16_inputs else x
    msg = jnp.maximum(xs[src] + edge_attr, 0.0)
    if bf16_inputs:
        msg = msg.astype(jnp.bfloat16).astype(jnp.float32)
    agg = jax.ops.segment_sum(msg, dst, num_segments=x.shape[0])
    h = agg + (1.0 + EPS) * x
    h = jnp.maximum(h @ w1 + b1, 0.0)
    h = jnp.maximum(h @ w2 + b2, 0.0)
    return h @ w3 + b3


if __name__ == "__main__":
    in_channels = 8
    out_channels = 32
    hidden = out_channels if out_channels > 2 else in_channels   # = 32
    n_nodes = 16
    n_edges = 160

    key = jax.random.PRNGKey(0)
    kx, ke, kea, k1, k2, k3 = jax.random.split(key, 6)

    x = jax.random.normal(kx, (n_nodes, in_channels), jnp.float32)
    edge_index = jax.random.randint(ke, (2, n_edges), 0, n_nodes, jnp.int32)
    edge_attr = jax.random.normal(kea, (n_edges, in_channels), jnp.float32)

    params = (*init_linear(k1, in_channels, hidden),
              *init_linear(k2, hidden, hidden),
              *init_linear(k3, hidden, out_channels))

    # tile_n=8, tile_e=128 -> a 2x2 grid at these small shapes, exercising both the
    # parallel node axis and the edge-reduction accumulator path.
    out = gine_conv_mlp(x, edge_index, edge_attr, params, tile_n=8, tile_e=128)
    out = jax.block_until_ready(out)
    assert out.shape == (n_nodes, out_channels)

    # Tight check vs a reference with the same bf16 rounding of x / messages.
    ref_b = reference(x, edge_index, edge_attr, params, bf16_inputs=True)
    assert jnp.allclose(out, ref_b, atol=2e-2, rtol=2e-2), \
        float(jnp.max(jnp.abs(out - ref_b)))

    # Sanity check vs the pure-f32 reference (difference = bf16 input rounding only).
    ref_f = reference(x, edge_index, edge_attr, params, bf16_inputs=False)
    assert jnp.allclose(out, ref_f, atol=1e-1, rtol=1e-1), \
        float(jnp.max(jnp.abs(out - ref_f)))

    print("KERNEL_OK")
</pallas_src>

<mosaic_0001>
module attributes {stable_mosaic.version = 11 : i64} {
  func.func @gine_conv_mlp_kernel(%arg0: i32, %arg1: i32, %arg2: memref<16x128xbf16, #tpu.memory_space<vmem>>, %arg3: memref<8x128xf32, #tpu.memory_space<vmem>>, %arg4: memref<128x1xi32, #tpu.memory_space<vmem>>, %arg5: memref<1x128xi32, #tpu.memory_space<vmem>>, %arg6: memref<128x128xf32, #tpu.memory_space<vmem>>, %arg7: memref<128x128xf32, #tpu.memory_space<vmem>>, %arg8: memref<1x128xf32, #tpu.memory_space<vmem>>, %arg9: memref<128x128xf32, #tpu.memory_space<vmem>>, %arg10: memref<1x128xf32, #tpu.memory_space<vmem>>, %arg11: memref<128x128xf32, #tpu.memory_space<vmem>>, %arg12: memref<1x128xf32, #tpu.memory_space<vmem>>, %arg13: memref<8x128xf32, #tpu.memory_space<vmem>>, %arg14: memref<8x128xf32, #tpu.memory_space<vmem>>) attributes {dimension_semantics = [#tpu.dimension_semantics<parallel>, #tpu.dimension_semantics<arbitrary>], iteration_bounds = array<i64: 2, 2>, scalar_prefetch = 0 : i64, scratch_operands = 1 : i64, tpu.core_type = #tpu.core_type<tc>, window_params = [{pipeline_mode = #tpu.pipeline_mode<synchronous>, transform_indices = @transform_0, window_bounds = array<i64: 16, 128>}, {transform_indices = @transform_1, window_bounds = array<i64: 8, 128>}, {transform_indices = @transform_2, window_bounds = array<i64: 128, 1>}, {transform_indices = @transform_3, window_bounds = array<i64: 1, 128>}, {transform_indices = @transform_4, window_bounds = array<i64: 128, 128>}, {pipeline_mode = #tpu.pipeline_mode<synchronous>, transform_indices = @transform_5, window_bounds = array<i64: 128, 128>}, {pipeline_mode = #tpu.pipeline_mode<synchronous>, transform_indices = @transform_6, window_bounds = array<i64: 1, 128>}, {pipeline_mode = #tpu.pipeline_mode<synchronous>, transform_indices = @transform_7, window_bounds = array<i64: 128, 128>}, {pipeline_mode = #tpu.pipeline_mode<synchronous>, transform_indices = @transform_8, window_bounds = array<i64: 1, 128>}, {pipeline_mode = #tpu.pipeline_mode<synchronous>, transform_indices = @transform_9, window_bounds = array<i64: 128, 128>}, {pipeline_mode = #tpu.pipeline_mode<synchronous>, transform_indices = @transform_10, window_bounds = array<i64: 1, 128>}, {transform_indices = @transform_11, window_bounds = array<i64: 8, 128>}]} {
    %c0_i32 = arith.constant 0 : i32
    %0 = arith.cmpi eq, %arg1, %c0_i32 : i32
    %1 = arith.extui %0 : i1 to i32
    %c0_i32_0 = arith.constant 0 : i32
    %2 = arith.cmpi ne, %1, %c0_i32_0 : i32
    scf.if %2 {
      %cst_15 = arith.constant 0.000000e+00 : f32
      %34 = vector.broadcast %cst_15 : f32 to vector<8x128xf32>
      %c0_16 = arith.constant 0 : index
      %c0_17 = arith.constant 0 : index
      %35 = vector.load %arg14[%c0_16, %c0_17] : memref<8x128xf32, #tpu.memory_space<vmem>>, vector<8x128xf32>
      tpu.vector_store %arg14[%c0_16, %c0_17], %34 {strides = array<i32>} : memref<8x128xf32, #tpu.memory_space<vmem>>, vector<8x128xf32>,
    } else {
    }
    %c0 = arith.constant 0 : index
    %c0_1 = arith.constant 0 : index
    %3 = vector.load %arg4[%c0, %c0_1] : memref<128x1xi32, #tpu.memory_space<vmem>>, vector<128x1xi32>
    %c0_2 = arith.constant 0 : index
    %c0_3 = arith.constant 0 : index
    %4 = vector.load %arg5[%c0_2, %c0_3] : memref<1x128xi32, #tpu.memory_space<vmem>>, vector<1x128xi32>
    %5 = tpu.iota {dimensions = array<i32: 1>} : vector<128x16xi32>
    %6 = vector.broadcast %3 : vector<128x1xi32> to vector<128x16xi32>
    %7 = arith.cmpi eq, %5, %6 : vector<128x16xi32>
    %8 = arith.extui %7 : vector<128x16xi1> to vector<128x16xi32>
    %9 = arith.sitofp %8 : vector<128x16xi32> to vector<128x16xf32>
    %10 = arith.truncf %9 : vector<128x16xf32> to vector<128x16xbf16>
    %c0_4 = arith.constant 0 : index
    %c0_5 = arith.constant 0 : index
    %11 = vector.load %arg2[%c0_4, %c0_5] : memref<16x128xbf16, #tpu.memory_space<vmem>>, vector<16x128xbf16>
    %cst = arith.constant dense<0.000000e+00> : vector<128x128xf32>
    %12 = tpu.matmul %10, %11, %cst {dimension_numbers = #tpu.dot_dimension_numbers<[1], [0], [0], [1], [0, 0, 1, 1], [], []>} : vector<128x16xbf16>, vector<16x128xbf16>, vector<128x128xf32> -> vector<128x128xf32>
    %c0_6 = arith.constant 0 : index
    %c0_7 = arith.constant 0 : index
    %13 = vector.load %arg6[%c0_6, %c0_7] : memref<128x128xf32, #tpu.memory_space<vmem>>, vector<128x128xf32>
    %14 = arith.addf %12, %13 : vector<128x128xf32>
    %cst_8 = arith.constant 0.000000e+00 : f32
    %15 = vector.broadcast %cst_8 : f32 to vector<128x128xf32>
    %16 = arith.maximumf %14, %15 : vector<128x128xf32>
    %c8_i32 = arith.constant 8 : i32
    %17 = arith.muli %arg0, %c8_i32 : i32
    %18 = tpu.iota {dimensions = array<i32: 0>} : vector<8x128xi32>
    %19 = vector.broadcast %17 : i32 to vector<8x128xi32>
    %20 = arith.addi %19, %18 : vector<8x128xi32>
    %21 = vector.broadcast %4 : vector<1x128xi32> to vector<8x128xi32>
    %22 = arith.cmpi eq, %20, %21 : vector<8x128xi32>
    %23 = arith.extui %22 : vector<8x128xi1> to vector<8x128xi32>
    %24 = arith.sitofp %23 : vector<8x128xi32> to vector<8x128xf32>
    %25 = arith.truncf %24 : vector<8x128xf32> to vector<8x128xbf16>
    %c0_9 = arith.constant 0 : index
    %c0_10 = arith.constant 0 : index
    %26 = vector.load %arg14[%c0_9, %c0_10] : memref<8x128xf32, #tpu.memory_space<vmem>>, vector<8x128xf32>
    %27 = arith.truncf %16 : vector<128x128xf32> to vector<128x128xbf16>
    %cst_11 = arith.constant dense<0.000000e+00> : vector<8x128xf32>
    %28 = tpu.matmul %25, %27, %cst_11 {dimension_numbers = #tpu.dot_dimension_numbers<[1], [0], [0], [1], [0, 0, 1, 1], [], []>} : vector<8x128xbf16>, vector<128x128xbf16>, vector<8x128xf32> -> vector<8x128xf32>
    %29 = arith.addf %26, %28 : vector<8x128xf32>
    %c0_12 = arith.constant 0 : index
    %c0_13 = arith.constant 0 : index
    %30 = vector.load %arg14[%c0_12, %c0_13] : memref<8x128xf32, #tpu.memory_space<vmem>>, vector<8x128xf32>
    tpu.vector_store %arg14[%c0_12, %c0_13], %29 {strides = array<i32>} : memref<8x128xf32, #tpu.memory_space<vmem>>, vector<8x128xf32>,
    %c1_i32 = arith.constant 1 : i32
    %31 = arith.cmpi eq, %arg1, %c1_i32 : i32
    %32 = arith.extui %31 : i1 to i32
    %c0_i32_14 = arith.constant 0 : i32
    %33 = arith.cmpi ne, %32, %c0_i32_14 : i32
    scf.if %33 {
      %c0_15 = arith.constant 0 : index
      %c0_16 = arith.constant 0 : index
      %34 = vector.load %arg14[%c0_15, %c0_16] : memref<8x128xf32, #tpu.memory_space<vmem>>, vector<8x128xf32>
      %c0_17 = arith.constant 0 : index
      %c0_18 = arith.constant 0 : index
      %35 = vector.load %arg3[%c0_17, %c0_18] : memref<8x128xf32, #tpu.memory_space<vmem>>, vector<8x128xf32>
      %cst_19 = arith.constant 1.000000e+00 : f32
      %36 = vector.broadcast %cst_19 : f32 to vector<8x128xf32>
      %37 = arith.mulf %36, %35 : vector<8x128xf32>
      %38 = arith.addf %34, %37 : vector<8x128xf32>
      %c0_20 = arith.constant 0 : index
      %c0_21 = arith.constant 0 : index
      %39 = vector.load %arg7[%c0_20, %c0_21] : memref<128x128xf32, #tpu.memory_space<vmem>>, vector<128x128xf32>
      %cst_22 = arith.constant dense<0.000000e+00> : vector<8x128xf32>
      %40 = tpu.matmul %38, %39, %cst_22 {dimension_numbers = #tpu.dot_dimension_numbers<[1], [0], [0], [1], [0, 0, 1, 1], [], []>} : vector<8x128xf32>, vector<128x128xf32>, vector<8x128xf32> -> vector<8x128xf32>
      %c0_23 = arith.constant 0 : index
      %c0_24 = arith.constant 0 : index
      %41 = vector.load %arg8[%c0_23, %c0_24] : memref<1x128xf32, #tpu.memory_space<vmem>>, vector<1x128xf32>
      %42 = vector.broadcast %41 : vector<1x128xf32> to vector<8x128xf32>
      %43 = arith.addf %40, %42 : vector<8x128xf32>
      %cst_25 = arith.constant 0.000000e+00 : f32
      %44 = vector.broadcast %cst_25 : f32 to vector<8x128xf32>
      %45 = arith.maximumf %43, %44 : vector<8x128xf32>
      %c0_26 = arith.constant 0 : index
      %c0_27 = arith.constant 0 : index
      %46 = vector.load %arg9[%c0_26, %c0_27] : memref<128x128xf32, #tpu.memory_space<vmem>>, vector<128x128xf32>
      %cst_28 = arith.constant dense<0.000000e+00> : vector<8x128xf32>
      %47 = tpu.matmul %45, %46, %cst_28 {dimension_numbers = #tpu.dot_dimension_numbers<[1], [0], [0], [1], [0, 0, 1, 1], [], []>} : vector<8x128xf32>, vector<128x128xf32>, vector<8x128xf32> -> vector<8x128xf32>
      %c0_29 = arith.constant 0 : index
      %c0_30 = arith.constant 0 : index
      %48 = vector.load %arg10[%c0_29, %c0_30] : memref<1x128xf32, #tpu.memory_space<vmem>>, vector<1x128xf32>
      %49 = vector.broadcast %48 : vector<1x128xf32> to vector<8x128xf32>
      %50 = arith.addf %47, %49 : vector<8x128xf32>
      %cst_31 = arith.constant 0.000000e+00 : f32
      %51 = vector.broadcast %cst_31 : f32 to vector<8x128xf32>
      %52 = arith.maximumf %50, %51 : vector<8x128xf32>
      %c0_32 = arith.constant 0 : index
      %c0_33 = arith.constant 0 : index
      %53 = vector.load %arg11[%c0_32, %c0_33] : memref<128x128xf32, #tpu.memory_space<vmem>>, vector<128x128xf32>
      %cst_34 = arith.constant dense<0.000000e+00> : vector<8x128xf32>
      %54 = tpu.matmul %52, %53, %cst_34 {dimension_numbers = #tpu.dot_dimension_numbers<[1], [0], [0], [1], [0, 0, 1, 1], [], []>} : vector<8x128xf32>, vector<128x128xf32>, vector<8x128xf32> -> vector<8x128xf32>
      %c0_35 = arith.constant 0 : index
      %c0_36 = arith.constant 0 : index
      %55 = vector.load %arg12[%c0_35, %c0_36] : memref<1x128xf32, #tpu.memory_space<vmem>>, vector<1x128xf32>
      %56 = vector.broadcast %55 : vector<1x128xf32> to vector<8x128xf32>
      %57 = arith.addf %54, %56 : vector<8x128xf32>
      %c0_37 = arith.constant 0 : index
      %c0_38 = arith.constant 0 : index
      %58 = vector.load %arg13[%c0_37, %c0_38] : memref<8x128xf32, #tpu.memory_space<vmem>>, vector<8x128xf32>
      tpu.vector_store %arg13[%c0_37, %c0_38], %57 {strides = array<i32>} : memref<8x128xf32, #tpu.memory_space<vmem>>, vector<8x128xf32>,
    } else {
    }
    return
  }
  func.func @transform_0(%arg0: i32, %arg1: i32) -> (i32, i32) {
    %c0_i32 = arith.constant 0 : i32
    %c0_i32_0 = arith.constant 0 : i32
    %c0_i32_1 = arith.constant 0 : i32
    return %c0_i32, %c0_i32_0 : i32, i32
  }
  func.func @transform_1(%arg0: i32, %arg1: i32) -> (i32, i32) {
    %c0_i32 = arith.constant 0 : i32
    %c0_i32_0 = arith.constant 0 : i32
    return %arg0, %c0_i32 : i32, i32
  }
  func.func @transform_2(%arg0: i32, %arg1: i32) -> (i32, i32) {
    %c0_i32 = arith.constant 0 : i32
    %c0_i32_0 = arith.constant 0 : i32
    return %arg1, %c0_i32 : i32, i32
  }
  func.func @transform_3(%arg0: i32, %arg1: i32) -> (i32, i32) {
    %c0_i32 = arith.constant 0 : i32
    %c0_i32_0 = arith.constant 0 : i32
    return %c0_i32, %arg1 : i32, i32
  }
  func.func @transform_4(%arg0: i32, %arg1: i32) -> (i32, i32) {
    %c0_i32 = arith.constant 0 : i32
    %c0_i32_0 = arith.constant 0 : i32
    return %arg1, %c0_i32 : i32, i32
  }
  func.func @transform_5(%arg0: i32, %arg1: i32) -> (i32, i32) {
    %c0_i32 = arith.constant 0 : i32
    %c0_i32_0 = arith.constant 0 : i32
    %c0_i32_1 = arith.constant 0 : i32
    return %c0_i32, %c0_i32_0 : i32, i32
  }
  func.func @transform_6(%arg0: i32, %arg1: i32) -> (i32, i32) {
    %c0_i32 = arith.constant 0 : i32
    %c0_i32_0 = arith.constant 0 : i32
    %c0_i32_1 = arith.constant 0 : i32
    return %c0_i32, %c0_i32_0 : i32, i32
  }
  func.func @transform_7(%arg0: i32, %arg1: i32) -> (i32, i32) {
    %c0_i32 = arith.constant 0 : i32
    %c0_i32_0 = arith.constant 0 : i32
    %c0_i32_1 = arith.constant 0 : i32
    return %c0_i32, %c0_i32_0 : i32, i32
  }
  func.func @transform_8(%arg0: i32, %arg1: i32) -> (i32, i32) {
    %c0_i32 = arith.constant 0 : i32
    %c0_i32_0 = arith.constant 0 : i32
    %c0_i32_1 = arith.constant 0 : i32
    return %c0_i32, %c0_i32_0 : i32, i32
  }
  func.func @transform_9(%arg0: i32, %arg1: i32) -> (i32, i32) {
    %c0_i32 = arith.constant 0 : i32
    %c0_i32_0 = arith.constant 0 : i32
    %c0_i32_1 = arith.constant 0 : i32
    return %c0_i32, %c0_i32_0 : i32, i32
  }
  func.func @transform_10(%arg0: i32, %arg1: i32) -> (i32, i32) {
    %c0_i32 = arith.constant 0 : i32
    %c0_i32_0 = arith.constant 0 : i32
    %c0_i32_1 = arith.constant 0 : i32
    return %c0_i32, %c0_i32_0 : i32, i32
  }
  func.func @transform_11(%arg0: i32, %arg1: i32) -> (i32, i32) {
    %c0_i32 = arith.constant 0 : i32
    %c0_i32_0 = arith.constant 0 : i32
    return %arg0, %c0_i32 : i32, i32
  }
}

</mosaic_0001>

<llo_original>
// kernel: tpu_custom_call.1
$region0: #{tpu_custom_call.1}
  #allocation0 [shape = 'u32[]', space=smem, size = 0x4, offset = 0x4, fixed_abs, tag = 'smem constant byte address 0x4 - core index']
  #allocation1 [shape = 'u32[144,128]{1,0:T(1,128)}', space=vmem, size = 0x12000, scoped, tag = 'internal scratch']
  #allocation2 [shape = 'f32[8,128]{1,0:T(8,128)}', space=vmem, size = 0x1000, scoped, tag = 'scratch operand']
  %s0 = inlined_call_operand.hbm [shape: bf16[16,128], index: 0, kind: input, shape index: {}]
  %s1 = inlined_call_operand.vmem [shape: f32[16,128], index: 1, kind: input, shape index: {}]
  %s2 = inlined_call_operand.vmem [shape: s32[256,1], index: 2, kind: input, shape index: {}]
  %s3 = inlined_call_operand.hbm [shape: s32[1,256], index: 3, kind: input, shape index: {}]
  %s4 = inlined_call_operand.vmem [shape: f32[256,128], index: 4, kind: input, shape index: {}]
  %s5 = inlined_call_operand.hbm [shape: f32[128,128], index: 5, kind: input, shape index: {}]
  %s6 = inlined_call_operand.vmem [shape: f32[1,128], index: 6, kind: input, shape index: {}]
  %s7 = inlined_call_operand.hbm [shape: f32[128,128], index: 7, kind: input, shape index: {}]
  %s8 = inlined_call_operand.vmem [shape: f32[1,128], index: 8, kind: input, shape index: {}]
  %s9 = inlined_call_operand.hbm [shape: f32[128,128], index: 9, kind: input, shape index: {}]
  %s10 = inlined_call_operand.vmem [shape: f32[1,128], index: 10, kind: input, shape index: {}]
  %s11 = inlined_call_operand.hbm [shape: f32[16,128], index: 11, kind: output, shape index: {}]
  %s12 = sld [smem:[#allocation0]]
  $region105: #{tpu_custom_call.1} parent=0
    _
  %s14 = ssub.s32 1, %s12
  %s15 = scalar_select 0, %s14, %s12
  $region1: #{tpu_custom_call.1} parent=0
    #allocation3 [shape = 'u8[4096]{0}', space=vmem, size = 0x1000, scoped, tag = 'input window, operand 0, single buffered']
    #allocation4 [shape = 's32[2]{0}', space=sflag, size = 0x8, scoped, tag = 'scoped memory for tpu_custom_call.1']
    #allocation5 [shape = 's32[2]{0}', space=sflag, size = 0x8, scoped, tag = 'scoped memory for tpu_custom_call.1']
    #allocation6 [shape = 'u8[1024]{0}', space=vmem, size = 0x400, scoped, tag = 'input window, operand 3']
    #allocation7 [shape = 's32[2]{0}', space=sflag, size = 0x8, scoped, tag = 'scoped memory for tpu_custom_call.1']
    #allocation8 [shape = 'u8[65536]{0}', space=vmem, size = 0x10000, scoped, tag = 'input window, operand 5, single buffered']
    #allocation9 [shape = 'u8[65536]{0}', space=vmem, size = 0x10000, scoped, tag = 'input window, operand 7, single buffered']
    #allocation10 [shape = 's32[1]{0}', space=sflag, size = 0x4, scoped, tag = 'scoped memory for tpu_custom_call.1']
    #allocation11 [shape = 'u8[65536]{0}', space=vmem, size = 0x10000, scoped, tag = 'input window, operand 9, single buffered']
    #allocation12 [shape = 'u8[8192]{0}', space=vmem, size = 0x2000, scoped, tag = 'output window, operand 0']
    %16 = vsyncpa [#allocation4], 0
    %17 = vsyncpa [#allocation7], 0
    %s18 = scalar_lea.sflag [#allocation7], 1
    %19 = vsyncpa %s18, 0
    %20 = vsyncpa [#allocation10], 0
    %21 = vsyncpa [#allocation5], 0
    %s22 = scalar_lea.sflag [#allocation5], 1
    %23 = vsyncpa %s22, 0
    loop: start=0, step=1, limit=6
    $region2: #{tpu_custom_call.1} parent=1 // loop_pre_header
      _
    $region3: #{tpu_custom_call.1} parent=1 // loop_header
      %s25 = sphi 0, %s29
      %p26 = scmp.ge.s32.totalorder %s25, 6
      %s32 = sphi 0, %s44
      %s33 = sphi 0, %s40
      %s34 = sphi 0, %s32
      %s35 = sphi 0, %s33
      %s36 = sphi 0, %s34
      %s37 = sphi 0, %s35
      %s45 = sphi 0, %s45
      %s47 = sphi 0, %s45
      %s48 = sphi 0, %s47
      %s62 = sphi 0, %s48
      %s68 = sphi 0, %s70
      %s71 = sphi 0, %s68
      %s72 = sphi 0, %s71
      %s88 = sphi 0, %s72
      %s94 = sphi 0, %s96
      %s97 = sphi 0, %s94
      %s98 = sphi 0, %s97
      %s114 = sphi 0, %s98
      %s120 = sphi 0, %s122
      %s123 = sphi 0, %s120
      %s124 = sphi 0, %s123
      %s140 = sphi 0, %s124
      %s146 = sphi 0, %s148
      %s149 = sphi 0, %s146
      %s150 = sphi 0, %s149
      %s166 = sphi 0, %s150
      %s170 = sphi 0, %s170
      %s172 = sphi 0, %s170
      %s173 = sphi 0, %s172
      %s187 = sphi 0, %s173
      %s191 = sphi 0, %s191
      %s193 = sphi 0, %s191
      %s194 = sphi 0, %s193
      %s208 = sphi 0, %s194
      %s212 = sphi 0, %s212
      %s214 = sphi 0, %s212
      %s215 = sphi 0, %s214
      %s229 = sphi 0, %s215
      %s233 = sphi 0, %s233
      %s235 = sphi 0, %s233
      %s236 = sphi 0, %s235
      %s250 = sphi 0, %s236
      %s254 = sphi 0, %s254
      %s256 = sphi 0, %s254
      %s257 = sphi 0, %s256
      %s271 = sphi 0, %s257
      %s275 = sphi 0, %s275
      %s277 = sphi 0, %s275
      %s278 = sphi 0, %s277
      %s292 = sphi 0, %s278
      %s298 = sphi 0, %s300
      %s301 = sphi 0, %s298
      %s302 = sphi 0, %s301
      %s318 = sphi 0, %s302
    $region4: #{tpu_custom_call.1} parent=1 // loop_header_branch
      %28 = sbr.rel (%p26) target = $region8
    $region5: #{tpu_custom_call.1} parent=1 // loop_body
      %s30 = ssub.s32 %s25, 1
      %s31 = ssub.s32 %s25, 2
      %s38 = sadd.s32 1, %s33
      %p39 = scmp.ge.s32.totalorder %s38, 2
      %s40 = scalar_select %p39, 0, %s38
      %s41 = sadd.s32 1, %s32
      %s42 = scalar_select %p39, %s41, %s32
      %p43 = scmp.ge.s32.totalorder %s42, 2
      %s44 = scalar_select %p43, 0, %s42
      %s46 = sadd.s32 %s45, 1
      %p49 = scmp.eq.s32.totalorder %s25, 3
      %p50 = scmp.ne.s32.totalorder %s45, %s47
      %p51 = scmp.eq.s32.totalorder %s25, 0
      %p52 = por %p50, %p51
      %p53 = scmp.ne.s32.totalorder %s45, %s47
      %p54 = scmp.eq.s32.totalorder %s30, 3
      %p55 = por %p53, %p54
      %p56 = scmp.ne.s32.totalorder %s47, %s48
      %p57 = scmp.eq.s32.totalorder %s30, 0
      %p58 = por %p56, %p57
      %p59 = scmp.ne.s32.totalorder %s47, %s48
      %p60 = scmp.eq.s32.totalorder %s31, 3
      %p61 = por %p59, %p60
      %p63 = scmp.ne.s32.totalorder %s48, %s62
      %p64 = scmp.eq.s32.totalorder %s31, 0
      %p65 = por %p63, %p64
      %s66 = ssub.s32 %s32, %s44
      %p67 = scmp.eq.s32.totalorder %s66, 0
      %s69 = sadd.s32 %s68, 1
      %s70 = scalar_select %p67, %s68, %s69
      %p73 = pneg %p67
      %p74 = scmp.eq.s32.totalorder %s25, 3
      %p75 = por %p73, %p74
      %p76 = scmp.ne.s32.totalorder %s68, %s71
      %p77 = scmp.eq.s32.totalorder %s25, 0
      %p78 = por %p76, %p77
      %p79 = scmp.ne.s32.totalorder %s68, %s71
      %p80 = scmp.eq.s32.totalorder %s30, 3
      %p81 = por %p79, %p80
      %p82 = scmp.ne.s32.totalorder %s71, %s72
      %p83 = scmp.eq.s32.totalorder %s30, 0
      %p84 = por %p82, %p83
      %p85 = scmp.ne.s32.totalorder %s71, %s72
      %p86 = scmp.eq.s32.totalorder %s31, 3
      %p87 = por %p85, %p86
      %p89 = scmp.ne.s32.totalorder %s72, %s88
      %p90 = scmp.eq.s32.totalorder %s31, 0
      %p91 = por %p89, %p90
      %s92 = ssub.s32 %s33, %s40
      %p93 = scmp.eq.s32.totalorder %s92, 0
      %s95 = sadd.s32 %s94, 1
      %s96 = scalar_select %p93, %s94, %s95
      %p99 = pneg %p93
      %p100 = scmp.eq.s32.totalorder %s25, 3
      %p101 = por %p99, %p100
      %p102 = scmp.ne.s32.totalorder %s94, %s97
      %p103 = scmp.eq.s32.totalorder %s25, 0
      %p104 = por %p102, %p103
      %p105 = scmp.ne.s32.totalorder %s94, %s97
      %p106 = scmp.eq.s32.totalorder %s30, 3
      %p107 = por %p105, %p106
      %p108 = scmp.ne.s32.totalorder %s97, %s98
      %p109 = scmp.eq.s32.totalorder %s30, 0
      %p110 = por %p108, %p109
      %p111 = scmp.ne.s32.totalorder %s97, %s98
      %p112 = scmp.eq.s32.totalorder %s31, 3
      %p113 = por %p111, %p112
      %p115 = scmp.ne.s32.totalorder %s98, %s114
      %p116 = scmp.eq.s32.totalorder %s31, 0
      %p117 = por %p115, %p116
      %s118 = ssub.s32 %s33, %s40
      %p119 = scmp.eq.s32.totalorder %s118, 0
      %s121 = sadd.s32 %s120, 1
      %s122 = scalar_select %p119, %s120, %s121
      %p125 = pneg %p119
      %p126 = scmp.eq.s32.totalorder %s25, 3
      %p127 = por %p125, %p126
      %p128 = scmp.ne.s32.totalorder %s120, %s123
      %p129 = scmp.eq.s32.totalorder %s25, 0
      %p130 = por %p128, %p129
      %p131 = scmp.ne.s32.totalorder %s120, %s123
      %p132 = scmp.eq.s32.totalorder %s30, 3
      %p133 = por %p131, %p132
      %p134 = scmp.ne.s32.totalorder %s123, %s124
      %p135 = scmp.eq.s32.totalorder %s30, 0
      %p136 = por %p134, %p135
      %p137 = scmp.ne.s32.totalorder %s123, %s124
      %p138 = scmp.eq.s32.totalorder %s31, 3
      %p139 = por %p137, %p138
      %p141 = scmp.ne.s32.totalorder %s124, %s140
      %p142 = scmp.eq.s32.totalorder %s31, 0
      %p143 = por %p141, %p142
      %s144 = ssub.s32 %s33, %s40
      %p145 = scmp.eq.s32.totalorder %s144, 0
      %s147 = sadd.s32 %s146, 1
      %s148 = scalar_select %p145, %s146, %s147
      %p151 = pneg %p145
      %p152 = scmp.eq.s32.totalorder %s25, 3
      %p153 = por %p151, %p152
      %p154 = scmp.ne.s32.totalorder %s146, %s149
      %p155 = scmp.eq.s32.totalorder %s25, 0
      %p156 = por %p154, %p155
      %p157 = scmp.ne.s32.totalorder %s146, %s149
      %p158 = scmp.eq.s32.totalorder %s30, 3
      %p159 = por %p157, %p158
      %p160 = scmp.ne.s32.totalorder %s149, %s150
      %p161 = scmp.eq.s32.totalorder %s30, 0
      %p162 = por %p160, %p161
      %p163 = scmp.ne.s32.totalorder %s149, %s150
      %p164 = scmp.eq.s32.totalorder %s31, 3
      %p165 = por %p163, %p164
      %p167 = scmp.ne.s32.totalorder %s150, %s166
      %p168 = scmp.eq.s32.totalorder %s31, 0
      %p169 = por %p167, %p168
      %s171 = sadd.s32 %s170, 1
      %p174 = scmp.eq.s32.totalorder %s25, 3
      %p175 = scmp.ne.s32.totalorder %s170, %s172
      %p176 = scmp.eq.s32.totalorder %s25, 0
      %p177 = por %p175, %p176
      %p178 = scmp.ne.s32.totalorder %s170, %s172
      %p179 = scmp.eq.s32.totalorder %s30, 3
      %p180 = por %p178, %p179
      %p181 = scmp.ne.s32.totalorder %s172, %s173
      %p182 = scmp.eq.s32.totalorder %s30, 0
      %p183 = por %p181, %p182
      %p184 = scmp.ne.s32.totalorder %s172, %s173
      %p185 = scmp.eq.s32.totalorder %s31, 3
      %p186 = por %p184, %p185
      %p188 = scmp.ne.s32.totalorder %s173, %s187
      %p189 = scmp.eq.s32.totalorder %s31, 0
      %p190 = por %p188, %p189
      %s192 = sadd.s32 %s191, 1
      %p195 = scmp.eq.s32.totalorder %s25, 3
      %p196 = scmp.ne.s32.totalorder %s191, %s193
      %p197 = scmp.eq.s32.totalorder %s25, 0
      %p198 = por %p196, %p197
      %p199 = scmp.ne.s32.totalorder %s191, %s193
      %p200 = scmp.eq.s32.totalorder %s30, 3
      %p201 = por %p199, %p200
      %p202 = scmp.ne.s32.totalorder %s193, %s194
      %p203 = scmp.eq.s32.totalorder %s30, 0
      %p204 = por %p202, %p203
      %p205 = scmp.ne.s32.totalorder %s193, %s194
      %p206 = scmp.eq.s32.totalorder %s31, 3
      %p207 = por %p205, %p206
      %p209 = scmp.ne.s32.totalorder %s194, %s208
      %p210 = scmp.eq.s32.totalorder %s31, 0
      %p211 = por %p209, %p210
      %s213 = sadd.s32 %s212, 1
      %p216 = scmp.eq.s32.totalorder %s25, 3
      %p217 = scmp.ne.s32.totalorder %s212, %s214
      %p218 = scmp.eq.s32.totalorder %s25, 0
      %p219 = por %p217, %p218
      %p220 = scmp.ne.s32.totalorder %s212, %s214
      %p221 = scmp.eq.s32.totalorder %s30, 3
      %p222 = por %p220, %p221
      %p223 = scmp.ne.s32.totalorder %s214, %s215
      %p224 = scmp.eq.s32.totalorder %s30, 0
      %p225 = por %p223, %p224
      %p226 = scmp.ne.s32.totalorder %s214, %s215
      %p227 = scmp.eq.s32.totalorder %s31, 3
      %p228 = por %p226, %p227
      %p230 = scmp.ne.s32.totalorder %s215, %s229
      %p231 = scmp.eq.s32.totalorder %s31, 0
      %p232 = por %p230, %p231
      %s234 = sadd.s32 %s233, 1
      %p237 = scmp.eq.s32.totalorder %s25, 3
      %p238 = scmp.ne.s32.totalorder %s233, %s235
      %p239 = scmp.eq.s32.totalorder %s25, 0
      %p240 = por %p238, %p239
      %p241 = scmp.ne.s32.totalorder %s233, %s235
      %p242 = scmp.eq.s32.totalorder %s30, 3
      %p243 = por %p241, %p242
      %p244 = scmp.ne.s32.totalorder %s235, %s236
      %p245 = scmp.eq.s32.totalorder %s30, 0
      %p246 = por %p244, %p245
      %p247 = scmp.ne.s32.totalorder %s235, %s236
      %p248 = scmp.eq.s32.totalorder %s31, 3
      %p249 = por %p247, %p248
      %p251 = scmp.ne.s32.totalorder %s236, %s250
      %p252 = scmp.eq.s32.totalorder %s31, 0
      %p253 = por %p251, %p252
      %s255 = sadd.s32 %s254, 1
      %p258 = scmp.eq.s32.totalorder %s25, 3
      %p259 = scmp.ne.s32.totalorder %s254, %s256
      %p260 = scmp.eq.s32.totalorder %s25, 0
      %p261 = por %p259, %p260
      %p262 = scmp.ne.s32.totalorder %s254, %s256
      %p263 = scmp.eq.s32.totalorder %s30, 3
      %p264 = por %p262, %p263
      %p265 = scmp.ne.s32.totalorder %s256, %s257
      %p266 = scmp.eq.s32.totalorder %s30, 0
      %p267 = por %p265, %p266
      %p268 = scmp.ne.s32.totalorder %s256, %s257
      %p269 = scmp.eq.s32.totalorder %s31, 3
      %p270 = por %p268, %p269
      %p272 = scmp.ne.s32.totalorder %s257, %s271
      %p273 = scmp.eq.s32.totalorder %s31, 0
      %p274 = por %p272, %p273
      %s276 = sadd.s32 %s275, 1
      %p279 = scmp.eq.s32.totalorder %s25, 3
      %p280 = scmp.ne.s32.totalorder %s275, %s277
      %p281 = scmp.eq.s32.totalorder %s25, 0
      %p282 = por %p280, %p281
      %p283 = scmp.ne.s32.totalorder %s275, %s277
      %p284 = scmp.eq.s32.totalorder %s30, 3
      %p285 = por %p283, %p284
      %p286 = scmp.ne.s32.totalorder %s277, %s278
      %p287 = scmp.eq.s32.totalorder %s30, 0
      %p288 = por %p286, %p287
      %p289 = scmp.ne.s32.totalorder %s277, %s278
      %p290 = scmp.eq.s32.totalorder %s31, 3
      %p291 = por %p289, %p290
      %p293 = scmp.ne.s32.totalorder %s278, %s292
      %p294 = scmp.eq.s32.totalorder %s31, 0
      %p295 = por %p293, %p294
      %s296 = ssub.s32 %s32, %s44
      %p297 = scmp.eq.s32.totalorder %s296, 0
      %s299 = sadd.s32 %s298, 1
      %s300 = scalar_select %p297, %s298, %s299
      %p303 = pneg %p297
      %p304 = scmp.eq.s32.totalorder %s25, 3
      %p305 = por %p303, %p304
      %p306 = scmp.ne.s32.totalorder %s298, %s301
      %p307 = scmp.eq.s32.totalorder %s25, 0
      %p308 = por %p306, %p307
      %p309 = scmp.ne.s32.totalorder %s298, %s301
      %p310 = scmp.eq.s32.totalorder %s30, 3
      %p311 = por %p309, %p310
      %p312 = scmp.ne.s32.totalorder %s301, %s302
      %p313 = scmp.eq.s32.totalorder %s30, 0
      %p314 = por %p312, %p313
      %p315 = scmp.ne.s32.totalorder %s301, %s302
      %p316 = scmp.eq.s32.totalorder %s31, 3
      %p317 = por %p315, %p316
      %p319 = scmp.ne.s32.totalorder %s302, %s318
      %p320 = scmp.eq.s32.totalorder %s31, 0
      %p321 = por %p319, %p320
      %p322 = scmp.le.s32.totalorder 1, %s25
      %p323 = scmp.lt.s32.totalorder %s25, 5
      %p324 = pnand %p322, %p323
      %p325 = pneg %p324
      // Predicated region
      $region9: #{tpu_custom_call.1} parent=5 // pred_check
        _
      $region10: #{tpu_custom_call.1} parent=5 // pred_check_branch
        %327 = sbr.rel (%p324) target = $region12
      $region11: #{tpu_custom_call.1} parent=5 // pred_region
        %s328 = ssub.s32 %s25, 1
        // Predicated region
        $region13: #{tpu_custom_call.1} parent=11 // pred_check
          %p329 = pneg %p58
        $region14: #{tpu_custom_call.1} parent=11 // pred_check_branch
          %331 = sbr.rel (%p329) target = $region16
        $region15: #{tpu_custom_call.1} parent=11 // pred_region
          %s333 = ssub.s32 128, 128
          %334 = vsyncadd [#allocation4], %s333
          %s335 = sshll.u32 [#allocation3], 4
          %s336 = int_to_ptr.vmem [resolvable:$true] %s335
          %341 = dma.hbm_to_vmem [thread:$0]  %s0, 128, %s336, [#allocation4], 64, 64, 4
        $region16: #{tpu_custom_call.1} parent=11 // pred_fallthru
          _
        // Predicated region
        $region17: #{tpu_custom_call.1} parent=11 // pred_check
          %p342 = pneg %p183
        $region18: #{tpu_custom_call.1} parent=11 // pred_check_branch
          %344 = sbr.rel (%p342) target = $region20
        $region19: #{tpu_custom_call.1} parent=11 // pred_region
          %s346 = ssub.s32 2048, 2048
          %347 = vsyncadd [#allocation7], %s346
          %s348 = sshll.u32 [#allocation8], 4
          %s349 = int_to_ptr.vmem [resolvable:$true] %s348
          %354 = dma.hbm_to_vmem [thread:$0]  %s5, 2048, %s349, [#allocation7], 128, 128, 8
        $region20: #{tpu_custom_call.1} parent=11 // pred_fallthru
          _
        // Predicated region
        $region21: #{tpu_custom_call.1} parent=11 // pred_check
          %p355 = pneg %p204
        $region22: #{tpu_custom_call.1} parent=11 // pred_check_branch
          %357 = sbr.rel (%p355) target = $region24
        $region23: #{tpu_custom_call.1} parent=11 // pred_region
          _
        $region24: #{tpu_custom_call.1} parent=11 // pred_fallthru
          _
        // Predicated region
        $region25: #{tpu_custom_call.1} parent=11 // pred_check
          %p358 = pneg %p225
        $region26: #{tpu_custom_call.1} parent=11 // pred_check_branch
          %360 = sbr.rel (%p358) target = $region28
        $region27: #{tpu_custom_call.1} parent=11 // pred_region
          %s362 = ssub.s32 2048, 2048
          %363 = vsyncadd [#allocation10], %s362
          %s364 = sshll.u32 [#allocation9], 4
          %s365 = int_to_ptr.vmem [resolvable:$true] %s364
          %370 = dma.hbm_to_vmem [thread:$0]  %s7, 2048, %s365, [#allocation10], 128, 128, 8
        $region28: #{tpu_custom_call.1} parent=11 // pred_fallthru
          _
        // Predicated region
        $region29: #{tpu_custom_call.1} parent=11 // pred_check
          %p371 = pneg %p246
        $region30: #{tpu_custom_call.1} parent=11 // pred_check_branch
          %373 = sbr.rel (%p371) target = $region32
        $region31: #{tpu_custom_call.1} parent=11 // pred_region
          _
        $region32: #{tpu_custom_call.1} parent=11 // pred_fallthru
          _
        // Predicated region
        $region33: #{tpu_custom_call.1} parent=11 // pred_check
          %p374 = pneg %p267
        $region34: #{tpu_custom_call.1} parent=11 // pred_check_branch
          %376 = sbr.rel (%p374) target = $region36
        $region35: #{tpu_custom_call.1} parent=11 // pred_region
          %s378 = ssub.s32 2048, 2048
          %379 = vsyncadd [#allocation10], %s378
          %s380 = sshll.u32 [#allocation11], 4
          %s381 = int_to_ptr.vmem [resolvable:$true] %s380
          %386 = dma.hbm_to_vmem [thread:$0]  %s9, 2048, %s381, [#allocation10], 128, 128, 8
        $region36: #{tpu_custom_call.1} parent=11 // pred_fallthru
          _
        // Predicated region
        $region37: #{tpu_custom_call.1} parent=11 // pred_check
          %p387 = pneg %p288
        $region38: #{tpu_custom_call.1} parent=11 // pred_check_branch
          %389 = sbr.rel (%p387) target = $region40
        $region39: #{tpu_custom_call.1} parent=11 // pred_region
          _
        $region40: #{tpu_custom_call.1} parent=11 // pred_fallthru
          _
      $region12: #{tpu_custom_call.1} parent=5 // pred_fallthru
        _
      %p390 = scmp.lt.s32.totalorder %s25, 4
      // Predicated region
      $region41: #{tpu_custom_call.1} parent=5 // pred_check
        %p391 = pneg %p390
      $region42: #{tpu_custom_call.1} parent=5 // pred_check_branch
        %393 = sbr.rel (%p391) target = $region44
      $region43: #{tpu_custom_call.1} parent=5 // pred_region
        // Predicated region
        $region45: #{tpu_custom_call.1} parent=43 // pred_check
          %p394 = pneg %p78
        $region46: #{tpu_custom_call.1} parent=43 // pred_check_branch
          %396 = sbr.rel (%p394) target = $region48
        $region47: #{tpu_custom_call.1} parent=43 // pred_region
          %p397 = scmp.lt.s32.totalorder %s32, 1
          %s398 = scalar_select %p397, %s32, 1
          %s399 = smul.addr %s398, 8
          %s400 = scalar_lea.vmem %s1, %s399
        $region48: #{tpu_custom_call.1} parent=43 // pred_fallthru
          _
        // Predicated region
        $region49: #{tpu_custom_call.1} parent=43 // pred_check
          %p401 = pneg %p104
        $region50: #{tpu_custom_call.1} parent=43 // pred_check_branch
          %403 = sbr.rel (%p401) target = $region52
        $region51: #{tpu_custom_call.1} parent=43 // pred_region
          %s404 = smul.u32 16, %s33
          %p405 = scmp.lt.s32.totalorder %s404, 31
          %s406 = scalar_select %p405, %s404, 31
          %s407 = smul.addr %s406, 8
          %s408 = scalar_lea.vmem %s2, %s407
          %s409 = smul.u32 16, %s33
        $region52: #{tpu_custom_call.1} parent=43 // pred_fallthru
          _
        // Predicated region
        $region53: #{tpu_custom_call.1} parent=43 // pred_check
          %p410 = pneg %p130
        $region54: #{tpu_custom_call.1} parent=43 // pred_check_branch
          %412 = sbr.rel (%p410) target = $region56
        $region55: #{tpu_custom_call.1} parent=43 // pred_region
          %s413 = sand.u32 %s25, 1
          %s414 = scalar_lea.sflag [#allocation7], %s413
          %s415 = sand.u32 %s120, 1
          %s416 = scalar_lea.vmem [#allocation6], %s415
          %s418 = ssub.s32 16, 16
          %419 = vsyncadd %s414, %s418
          %s420 = smul.addr %s33, 16
          %s421 = scalar_lea.hbm %s3, %s420
          %s423 = sshll.u32 %s416, 4
          %s424 = int_to_ptr.vmem [resolvable:$true] %s423
          %426 = dma.hbm_to_vmem [thread:$0]  %s421, 16, %s424, %s414
        $region56: #{tpu_custom_call.1} parent=43 // pred_fallthru
          _
        // Predicated region
        $region57: #{tpu_custom_call.1} parent=43 // pred_check
          %p427 = pneg %p156
        $region58: #{tpu_custom_call.1} parent=43 // pred_check_branch
          %429 = sbr.rel (%p427) target = $region60
        $region59: #{tpu_custom_call.1} parent=43 // pred_region
          %s430 = smul.u32 16, %s33
          %p431 = scmp.lt.s32.totalorder %s430, 31
          %s432 = scalar_select %p431, %s430, 31
          %s433 = smul.addr %s432, 8
          %s434 = scalar_lea.vmem %s4, %s433
          %s435 = smul.u32 16, %s33
        $region60: #{tpu_custom_call.1} parent=43 // pred_fallthru
          _
      $region44: #{tpu_custom_call.1} parent=5 // pred_fallthru
        _
      %p436 = scmp.le.s32.totalorder 1, %s25
      %p437 = scmp.lt.s32.totalorder %s25, 5
      %p438 = pnand %p436, %p437
      %p439 = pneg %p438
      // Predicated region
      $region61: #{tpu_custom_call.1} parent=5 // pred_check
        _
      $region62: #{tpu_custom_call.1} parent=5 // pred_check_branch
        %441 = sbr.rel (%p438) target = $region64
      $region63: #{tpu_custom_call.1} parent=5 // pred_region
        %s442 = ssub.s32 %s25, 1
        // Predicated region
        $region65: #{tpu_custom_call.1} parent=63 // pred_check
          %p443 = pneg %p58
        $region66: #{tpu_custom_call.1} parent=63 // pred_check_branch
          %445 = sbr.rel (%p443) target = $region68
        $region67: #{tpu_custom_call.1} parent=63 // pred_region
          %446 = dma.done [#allocation4], 128
        $region68: #{tpu_custom_call.1} parent=63 // pred_fallthru
          _
        %s447 = sand.u32 %s30, 1
        %s448 = scalar_lea.sflag [#allocation7], %s447
        %s449 = sand.u32 %s123, 1
        %s450 = scalar_lea.vmem [#allocation6], %s449
        // Predicated region
        $region69: #{tpu_custom_call.1} parent=63 // pred_check
          %p451 = pneg %p136
        $region70: #{tpu_custom_call.1} parent=63 // pred_check_branch
          %453 = sbr.rel (%p451) target = $region72
        $region71: #{tpu_custom_call.1} parent=63 // pred_region
          %454 = dma.done %s448, 16
        $region72: #{tpu_custom_call.1} parent=63 // pred_fallthru
          _
        // Predicated region
        $region73: #{tpu_custom_call.1} parent=63 // pred_check
          %p455 = pneg %p183
        $region74: #{tpu_custom_call.1} parent=63 // pred_check_branch
          %457 = sbr.rel (%p455) target = $region76
        $region75: #{tpu_custom_call.1} parent=63 // pred_region
          %458 = dma.done [#allocation7], 2048
        $region76: #{tpu_custom_call.1} parent=63 // pred_fallthru
          _
        // Predicated region
        $region77: #{tpu_custom_call.1} parent=63 // pred_check
          %p459 = pneg %p225
        $region78: #{tpu_custom_call.1} parent=63 // pred_check_branch
          %461 = sbr.rel (%p459) target = $region80
        $region79: #{tpu_custom_call.1} parent=63 // pred_region
          %462 = dma.done [#allocation10], 2048
        $region80: #{tpu_custom_call.1} parent=63 // pred_fallthru
          _
        // Predicated region
        $region81: #{tpu_custom_call.1} parent=63 // pred_check
          %p463 = pneg %p267
        $region82: #{tpu_custom_call.1} parent=63 // pred_check_branch
          %465 = sbr.rel (%p463) target = $region84
        $region83: #{tpu_custom_call.1} parent=63 // pred_region
          %466 = dma.done [#allocation10], 2048
        $region84: #{tpu_custom_call.1} parent=63 // pred_fallthru
          _
        %p467 = pneg %p58
        %p468 = pneg %p55
        %p469 = scmp.lt.s32.totalorder %s34, 1
        %s470 = scalar_select %p469, %s34, 1
        %s471 = smul.addr %s470, 8
        %s472 = scalar_lea.vmem %s1, %s471
        %p473 = pneg %p84
        %p474 = pneg %p81
        %s475 = smul.u32 16, %s35
        %p476 = scmp.lt.s32.totalorder %s475, 31
        %s477 = scalar_select %p476, %s475, 31
        %s478 = smul.addr %s477, 8
        %s479 = scalar_lea.vmem %s2, %s478
        %p480 = pneg %p110
        %p481 = pneg %p107
        %s482 = sand.u32 %s30, 1
        %s483 = scalar_lea.sflag [#allocation7], %s482
        %s484 = sand.u32 %s123, 1
        %s485 = scalar_lea.vmem [#allocation6], %s484
        %p486 = pneg %p136
        %p487 = pneg %p133
        %s488 = smul.u32 16, %s35
        %p489 = scmp.lt.s32.totalorder %s488, 31
        %s490 = scalar_select %p489, %s488, 31
        %s491 = smul.addr %s490, 8
        %s492 = scalar_lea.vmem %s4, %s491
        %p493 = pneg %p162
        %p494 = pneg %p159
        %p495 = pneg %p183
        %p496 = pneg %p180
        %p497 = pneg %p204
        %p498 = pneg %p201
        %p499 = pneg %p225
        %p500 = pneg %p222
        %p501 = pneg %p246
        %p502 = pneg %p243
        %p503 = pneg %p267
        %p504 = pneg %p264
        %p505 = pneg %p288
        %p506 = pneg %p285
        %p507 = pneg %p314
        %p508 = pneg %p311
        %s509 = sand.u32 %s301, 1
        %s510 = scalar_lea.sflag [#allocation5], %s509
        %s511 = sand.u32 %s301, 1
        %s512 = smul.addr %s511, 8
        %s513 = scalar_lea.vmem [#allocation12], %s512
        %p514 = scmp.lt.s32.totalorder %s34, 1
        %s515 = scalar_select %p514, %s34, 1
        %s516 = smul.addr %s515, 8
        %s517 = scalar_lea.vmem %s1, %s516
        %s518 = smul.u32 16, %s35
        %p519 = scmp.lt.s32.totalorder %s518, 31
        %s520 = scalar_select %p519, %s518, 31
        %s521 = smul.addr %s520, 8
        %s522 = scalar_lea.vmem %s2, %s521
        %s523 = smul.u32 16, %s35
        %s524 = smul.u32 16, %s35
        %p525 = scmp.lt.s32.totalorder %s524, 31
        %s526 = scalar_select %p525, %s524, 31
        %s527 = smul.addr %s526, 8
        %s528 = scalar_lea.vmem %s4, %s527
        %s529 = smul.u32 16, %s35
        %p531 = scmp.eq.s32.totalorder %s35, 0
        // Predicated region
        $region85: #{tpu_custom_call.1} parent=63 // pred_check
          %p532 = pneg %p531
        $region86: #{tpu_custom_call.1} parent=63 // pred_check_branch
          %534 = sbr.rel (%p532) target = $region88
        $region87: #{tpu_custom_call.1} parent=63 // pred_region
          %535 = vst [vmem:[#allocation2] sm:$0xff] 0.0
        $region88: #{tpu_custom_call.1} parent=63 // pred_fallthru
          _
        %v536 = vld [vmem:[%s522] sm:$0xff]
        %v537 = vld [vmem:[%s522 + $0x8] sm:$0xff]
        %v538 = vld [vmem:[%s522 + $0x10] sm:$0xff]
        %v539 = vld [vmem:[%s522 + $0x18] sm:$0xff]
        %v540 = vld [vmem:[%s522 + $0x20] sm:$0xff]
        %v541 = vld [vmem:[%s522 + $0x28] sm:$0xff]
        %v542 = vld [vmem:[%s522 + $0x30] sm:$0xff]
        %v543 = vld [vmem:[%s522 + $0x38] sm:$0xff]
        %v544 = vld [vmem:[%s522 + $0x40] sm:$0xff]
        %v545 = vld [vmem:[%s522 + $0x48] sm:$0xff]
        %v546 = vld [vmem:[%s522 + $0x50] sm:$0xff]
        %v547 = vld [vmem:[%s522 + $0x58] sm:$0xff]
        %v548 = vld [vmem:[%s522 + $0x60] sm:$0xff]
        %v549 = vld [vmem:[%s522 + $0x68] sm:$0xff]
        %v550 = vld [vmem:[%s522 + $0x70] sm:$0xff]
        %v551 = vld [vmem:[%s522 + $0x78] sm:$0xff]
        %v552 = vld [vmem:[%s450] sm:$0x1]
        %v553 = vlaneseq
        %v554 = vand.u32 %v553, 127
        %555 = vset.pattern.permute.xlu0 0
        %556 = vperm.xlu0 %555, %v536
        %v557 = vpop.permute.xlu0 %556
        %558 = vset.pattern.permute.xlu0 0
        %559 = vperm.xlu0 %558, %v537
        %v560 = vpop.permute.xlu0 %559
        %561 = vset.pattern.permute.xlu0 0
        %562 = vperm.xlu0 %561, %v538
        %v563 = vpop.permute.xlu0 %562
        %564 = vset.pattern.permute.xlu0 0
        %565 = vperm.xlu0 %564, %v539
        %v566 = vpop.permute.xlu0 %565
        %567 = vset.pattern.permute.xlu0 0
        %568 = vperm.xlu0 %567, %v540
        %v569 = vpop.permute.xlu0 %568
        %570 = vset.pattern.permute.xlu0 0
        %571 = vperm.xlu0 %570, %v541
        %v572 = vpop.permute.xlu0 %571
        %573 = vset.pattern.permute.xlu0 0
        %574 = vperm.xlu0 %573, %v542
        %v575 = vpop.permute.xlu0 %574
        %576 = vset.pattern.permute.xlu0 0
        %577 = vperm.xlu0 %576, %v543
        %v578 = vpop.permute.xlu0 %577
        %579 = vset.pattern.permute.xlu0 0
        %580 = vperm.xlu0 %579, %v544
        %v581 = vpop.permute.xlu0 %580
        %582 = vset.pattern.permute.xlu0 0
        %583 = vperm.xlu0 %582, %v545
        %v584 = vpop.permute.xlu0 %583
        %585 = vset.pattern.permute.xlu0 0
        %586 = vperm.xlu0 %585, %v546
        %v587 = vpop.permute.xlu0 %586
        %588 = vset.pattern.permute.xlu0 0
        %589 = vperm.xlu0 %588, %v547
        %v590 = vpop.permute.xlu0 %589
        %591 = vset.pattern.permute.xlu0 0
        %592 = vperm.xlu0 %591, %v548
        %v593 = vpop.permute.xlu0 %592
        %594 = vset.pattern.permute.xlu0 0
        %595 = vperm.xlu0 %594, %v549
        %v596 = vpop.permute.xlu0 %595
        %597 = vset.pattern.permute.xlu0 0
        %598 = vperm.xlu0 %597, %v550
        %v599 = vpop.permute.xlu0 %598
        %600 = vset.pattern.permute.xlu0 0
        %601 = vperm.xlu0 %600, %v551
        %v602 = vpop.permute.xlu0 %601
        %vm603 = vcmp.eq.s32.totalorder %v554, %v557
        %vm604 = vcmp.eq.s32.totalorder %v554, %v560
        %vm605 = vcmp.eq.s32.totalorder %v554, %v563
        %vm606 = vcmp.eq.s32.totalorder %v554, %v566
        %vm607 = vcmp.eq.s32.totalorder %v554, %v569
        %vm608 = vcmp.eq.s32.totalorder %v554, %v572
        %vm609 = vcmp.eq.s32.totalorder %v554, %v575
        %vm610 = vcmp.eq.s32.totalorder %v554, %v578
        %vm611 = vcmp.eq.s32.totalorder %v554, %v581
        %vm612 = vcmp.eq.s32.totalorder %v554, %v584
        %vm613 = vcmp.eq.s32.totalorder %v554, %v587
        %vm614 = vcmp.eq.s32.totalorder %v554, %v590
        %vm615 = vcmp.eq.s32.totalorder %v554, %v593
        %vm616 = vcmp.eq.s32.totalorder %v554, %v596
        %vm617 = vcmp.eq.s32.totalorder %v554, %v599
        %vm618 = vcmp.eq.s32.totalorder %v554, %v602
        %v619 = vsel %vm603, 1, 0
        %v620 = vsel %vm604, 1, 0
        %v621 = vsel %vm605, 1, 0
        %v622 = vsel %vm606, 1, 0
        %v623 = vsel %vm607, 1, 0
        %v624 = vsel %vm608, 1, 0
        %v625 = vsel %vm609, 1, 0
        %v626 = vsel %vm610, 1, 0
        %v627 = vsel %vm611, 1, 0
        %v628 = vsel %vm612, 1, 0
        %v629 = vsel %vm613, 1, 0
        %v630 = vsel %vm614, 1, 0
        %v631 = vsel %vm615, 1, 0
        %v632 = vsel %vm616, 1, 0
        %v633 = vsel %vm617, 1, 0
        %v634 = vsel %vm618, 1, 0
        %v635 = vcvt.s32.f32 %v619
        %v636 = vcvt.s32.f32 %v620
        %v637 = vcvt.s32.f32 %v621
        %v638 = vcvt.s32.f32 %v622
        %v639 = vcvt.s32.f32 %v623
        %v640 = vcvt.s32.f32 %v624
        %v641 = vcvt.s32.f32 %v625
        %v642 = vcvt.s32.f32 %v626
        %v643 = vcvt.s32.f32 %v627
        %v644 = vcvt.s32.f32 %v628
        %v645 = vcvt.s32.f32 %v629
        %v646 = vcvt.s32.f32 %v630
        %v647 = vcvt.s32.f32 %v631
        %v648 = vcvt.s32.f32 %v632
        %v649 = vcvt.s32.f32 %v633
        %v650 = vcvt.s32.f32 %v634
        %v651 = vpack.c.bf16 %v636, %v635
        %v652 = vpack.c.bf16 %v638, %v637
        %v653 = vpack.c.bf16 %v640, %v639
        %v654 = vpack.c.bf16 %v642, %v641
        %v655 = vpack.c.bf16 %v644, %v643
        %v656 = vpack.c.bf16 %v646, %v645
        %v657 = vpack.c.bf16 %v648, %v647
        %v658 = vpack.c.bf16 %v650, %v649
        %v659 = vld [vmem:[#allocation3] sm:$0xf]
        %v660 = vld [vmem:[#allocation3 + $0x4] sm:$0xf]
        %v661 = vld [vmem:[%s528] sm:$0xff]
        %v662 = vld [vmem:[%s528 + $0x8] sm:$0xff]
        %v663 = vld [vmem:[%s528 + $0x10] sm:$0xff]
        %v664 = vld [vmem:[%s528 + $0x18] sm:$0xff]
        %v665 = vld [vmem:[%s528 + $0x20] sm:$0xff]
        %v666 = vld [vmem:[%s528 + $0x28] sm:$0xff]
        %v667 = vld [vmem:[%s528 + $0x30] sm:$0xff]
        %v668 = vld [vmem:[%s528 + $0x38] sm:$0xff]
        %v669 = vld [vmem:[%s528 + $0x40] sm:$0xff]
        %v670 = vld [vmem:[%s528 + $0x48] sm:$0xff]
        %v671 = vld [vmem:[%s528 + $0x50] sm:$0xff]
        %v672 = vld [vmem:[%s528 + $0x58] sm:$0xff]
        %v673 = vld [vmem:[%s528 + $0x60] sm:$0xff]
        %v674 = vld [vmem:[%s528 + $0x68] sm:$0xff]
        %v675 = vld [vmem:[%s528 + $0x70] sm:$0xff]
        %v676 = vld [vmem:[%s528 + $0x78] sm:$0xff]
        %v679 = vunpack.c.l.b16 %v659
        %v680 = vunpack.c.l.b16 %v660
        %v681 = vpack.c.b16 %v680, %v679
        %vm683 = vcmask 130048
        %v685 = vsel %vm683, %v651, 0
        %v688 = vsel %vm683, %v652, 0
        %v691 = vsel %vm683, %v653, 0
        %v694 = vsel %vm683, %v654, 0
        %v697 = vsel %vm683, %v655, 0
        %v700 = vsel %vm683, %v656, 0
        %v703 = vsel %vm683, %v657, 0
        %v706 = vsel %vm683, %v658, 0
        %708 = vmatprep.subr.bf16.mxu0 0
        %709 = vmatpush1.bf16.msra.mxu0 %v681
        %710 = vmatprep.subr.bf16.mxu0 0
        %711 = vmatpush1.bf16.msra.mxu0 0
        %712 = vmatprep.subr.bf16.mxu0 0
        %713 = vmatpush1.bf16.msra.mxu0 0
        %714 = vmatprep.subr.bf16.mxu0 0
        %715 = vmatpush1.bf16.msra.mxu0 0
        %716 = vmatprep.subr.bf16.mxu0 0
        %717 = vmatpush1.bf16.msra.mxu0 0
        %718 = vmatprep.subr.bf16.mxu0 0
        %719 = vmatpush1.bf16.msra.mxu0 0
        %720 = vmatprep.subr.bf16.mxu0 0
        %721 = vmatpush1.bf16.msra.mxu0 0
        %722 = vmatprep.subr.bf16.mxu0 0
        %723 = vmatpush1.bf16.msra.mxu0 0
        %724 = vmatprep.subr.bf16.mxu0 0
        %725 = vmatpush1.bf16.msra.mxu0 0
        %726 = vmatprep.subr.bf16.mxu0 0
        %727 = vmatpush1.bf16.msra.mxu0 0
        %728 = vmatprep.subr.bf16.mxu0 0
        %729 = vmatpush1.bf16.msra.mxu0 0
        %730 = vmatprep.subr.bf16.mxu0 0
        %731 = vmatpush1.bf16.msra.mxu0 0
        %732 = vmatprep.subr.bf16.mxu0 0
        %733 = vmatpush1.bf16.msra.mxu0 0
        %734 = vmatprep.subr.bf16.mxu0 0
        %735 = vmatpush1.bf16.msra.mxu0 0
        %736 = vmatprep.subr.bf16.mxu0 0
        %737 = vmatpush1.bf16.msra.mxu0 0
        %738 = vmatprep.subr.bf16.mxu0 0
        %739 = vmatpush1.bf16.msra.mxu0 0
        %740 = vmatprep.mubr.bf16.mxu0 0
        %741 = vmatmul.mubr.bf16.gmra.mrb[0].mxu0 %v685
        %v742 = vpop.f32.mrb[0].mxu0
        %v743 = vadd.f32 %v661, %v742
        %v744 = vpop.f32.mrb[0].mxu0
        %v745 = vpop.f32.mrb[0].mxu0
        %v746 = vadd.f32 %v662, %v745
        %v747 = vpop.f32.mrb[0].mxu0
        %748 = vmatprep.mubr.bf16.mxu0 0
        %749 = vmatmul.mubr.bf16.gmra.mrb[0].mxu0 %v688
        %v750 = vpop.f32.mrb[0].mxu0
        %v751 = vadd.f32 %v663, %v750
        %v752 = vpop.f32.mrb[0].mxu0
        %v753 = vpop.f32.mrb[0].mxu0
        %v754 = vadd.f32 %v664, %v753
        %v755 = vpop.f32.mrb[0].mxu0
        %756 = vmatprep.mubr.bf16.mxu0 0
        %757 = vmatmul.mubr.bf16.gmra.mrb[0].mxu0 %v691
        %v758 = vpop.f32.mrb[0].mxu0
        %v759 = vadd.f32 %v665, %v758
        %v760 = vpop.f32.mrb[0].mxu0
        %v761 = vpop.f32.mrb[0].mxu0
        %v762 = vadd.f32 %v666, %v761
        %v763 = vpop.f32.mrb[0].mxu0
        %764 = vmatprep.mubr.bf16.mxu0 0
        %765 = vmatmul.mubr.bf16.gmra.mrb[0].mxu0 %v694
        %v766 = vpop.f32.mrb[0].mxu0
        %v767 = vadd.f32 %v667, %v766
        %v768 = vpop.f32.mrb[0].mxu0
        %v769 = vpop.f32.mrb[0].mxu0
        %v770 = vadd.f32 %v668, %v769
        %v771 = vpop.f32.mrb[0].mxu0
        %772 = vmatprep.mubr.bf16.mxu0 0
        %773 = vmatmul.mubr.bf16.gmra.mrb[0].mxu0 %v697
        %v774 = vpop.f32.mrb[0].mxu0
        %v775 = vadd.f32 %v669, %v774
        %v776 = vpop.f32.mrb[0].mxu0
        %v777 = vpop.f32.mrb[0].mxu0
        %v778 = vadd.f32 %v670, %v777
        %v779 = vpop.f32.mrb[0].mxu0
        %780 = vmatprep.mubr.bf16.mxu0 0
        %781 = vmatmul.mubr.bf16.gmra.mrb[0].mxu0 %v700
        %v782 = vpop.f32.mrb[0].mxu0
        %v783 = vadd.f32 %v671, %v782
        %v784 = vpop.f32.mrb[0].mxu0
        %v785 = vpop.f32.mrb[0].mxu0
        %v786 = vadd.f32 %v672, %v785
        %v787 = vpop.f32.mrb[0].mxu0
        %788 = vmatprep.mubr.bf16.mxu0 0
        %789 = vmatmul.mubr.bf16.gmra.mrb[0].mxu0 %v703
        %v790 = vpop.f32.mrb[0].mxu0
        %v791 = vadd.f32 %v673, %v790
        %v792 = vpop.f32.mrb[0].mxu0
        %v793 = vpop.f32.mrb[0].mxu0
        %v794 = vadd.f32 %v674, %v793
        %v795 = vpop.f32.mrb[0].mxu0
        %796 = vmatprep.mubr.bf16.mxu0 0
        %797 = vmatmul.mubr.bf16.gmra.mrb[0].mxu0 %v706
        %v798 = vpop.f32.mrb[0].mxu0
        %v799 = vadd.f32 %v675, %v798
        %v800 = vpop.f32.mrb[0].mxu0
        %v801 = vpop.f32.mrb[0].mxu0
        %v802 = vadd.f32 %v676, %v801
        %v803 = vpop.f32.mrb[0].mxu0
        %804 = vdwg.mxu0
        %v805 = vmax.f32 %v743, 0.0
        %v806 = vmax.f32 %v746, 0.0
        %v807 = vmax.f32 %v751, 0.0
        %v808 = vmax.f32 %v754, 0.0
        %v809 = vmax.f32 %v759, 0.0
        %v810 = vmax.f32 %v762, 0.0
        %v811 = vmax.f32 %v767, 0.0
        %v812 = vmax.f32 %v770, 0.0
        %v813 = vmax.f32 %v775, 0.0
        %v814 = vmax.f32 %v778, 0.0
        %v815 = vmax.f32 %v783, 0.0
        %v816 = vmax.f32 %v786, 0.0
        %v817 = vmax.f32 %v791, 0.0
        %v818 = vmax.f32 %v794, 0.0
        %v819 = vmax.f32 %v799, 0.0
        %v820 = vmax.f32 %v802, 0.0
        %s821 = smul.u32 %s34, 8
        %v822 = vlaneseq
        %v823 = vshrl.u32 %v822, 7
        %v824 = vstv %s821
        %v825 = vadd.s32 %v824, %v823
        %v826 = vlaneseq
        %v827 = vshrl.u32 %v826, 7
        %v828 = vsub.s32 0, %v827
        %v829 = vrot.slane %v552, %v828
        %vm830 = vcmp.eq.s32.totalorder %v825, %v829
        %v831 = vsel %vm830, 1, 0
        %v832 = vcvt.s32.f32 %v831
        %v833 = vpack.c.bf16 %v832, %v832
        %v834 = vld [vmem:[#allocation2] sm:$0xff]
        %v835 = vpack.c.bf16 %v806, %v805
        %v836 = vpack.c.bf16 %v808, %v807
        %v837 = vpack.c.bf16 %v810, %v809
        %v838 = vpack.c.bf16 %v812, %v811
        %v839 = vpack.c.bf16 %v814, %v813
        %v840 = vpack.c.bf16 %v816, %v815
        %v841 = vpack.c.bf16 %v818, %v817
        %v842 = vpack.c.bf16 %v820, %v819
        %843 = vmatprep.subr.bf16.mxu0 0
        %844 = vmatpush1.bf16.msra.mxu0 %v835
        %845 = vmatprep.subr.bf16.mxu0 0
        %846 = vmatpush1.bf16.msra.mxu0 %v836
        %847 = vmatprep.subr.bf16.mxu0 0
        %848 = vmatpush1.bf16.msra.mxu0 %v837
        %849 = vmatprep.subr.bf16.mxu0 0
        %850 = vmatpush1.bf16.msra.mxu0 %v838
        %851 = vmatprep.subr.bf16.mxu0 0
        %852 = vmatpush1.bf16.msra.mxu0 %v839
        %853 = vmatprep.subr.bf16.mxu0 0
        %854 = vmatpush1.bf16.msra.mxu0 %v840
        %855 = vmatprep.subr.bf16.mxu0 0
        %856 = vmatpush1.bf16.msra.mxu0 %v841
        %857 = vmatprep.subr.bf16.mxu0 0
        %858 = vmatpush1.bf16.msra.mxu0 %v842
        %859 = vmatprep.subr.bf16.mxu0 0
        %860 = vmatpush1.bf16.msra.mxu0 0
        %861 = vmatprep.subr.bf16.mxu0 0
        %862 = vmatpush1.bf16.msra.mxu0 0
        %863 = vmatprep.subr.bf16.mxu0 0
        %864 = vmatpush1.bf16.msra.mxu0 0
        %865 = vmatprep.subr.bf16.mxu0 0
        %866 = vmatpush1.bf16.msra.mxu0 0
        %867 = vmatprep.subr.bf16.mxu0 0
        %868 = vmatpush1.bf16.msra.mxu0 0
        %869 = vmatprep.subr.bf16.mxu0 0
        %870 = vmatpush1.bf16.msra.mxu0 0
        %871 = vmatprep.subr.bf16.mxu0 0
        %872 = vmatpush1.bf16.msra.mxu0 0
        %873 = vmatprep.subr.bf16.mxu0 0
        %874 = vmatpush1.bf16.msra.mxu0 0
        %875 = vmatprep.mubr.bf16.mxu0 0
        %876 = vmatmul.mubr.bf16.gmra.mrb[0].mxu0 %v833
        %v877 = vpop.f32.mrb[0].mxu0
        %v878 = vadd.f32 0.0, %v877
        %v879 = vpop.f32.mrb[0].mxu0
        %v880 = vpop.f32.mrb[0].mxu0
        %v881 = vpop.f32.mrb[0].mxu0
        %882 = vdwg.mxu0
        %v883 = vadd.f32 %v834, %v878
        %884 = vst [vmem:[#allocation2] sm:$0xff] %v883
        %p885 = scmp.eq.s32.totalorder %s35, 1
        // Predicated region
        $region89: #{tpu_custom_call.1} parent=63 // pred_check
          %p886 = pneg %p885
        $region90: #{tpu_custom_call.1} parent=63 // pred_check_branch
          %888 = sbr.rel (%p886) target = $region92
        $region91: #{tpu_custom_call.1} parent=63 // pred_region
          %v889 = vld [vmem:[#allocation2] sm:$0xff]
          %v890 = vld [vmem:[%s517] sm:$0xff]
          %v891 = vadd.f32 %v889, %v890
          %v892 = vld [vmem:[#allocation8] sm:$0xff]
          %v893 = vld [vmem:[#allocation8 + $0x8] sm:$0xff]
          %v894 = vld [vmem:[#allocation8 + $0x10] sm:$0xff]
          %v895 = vld [vmem:[#allocation8 + $0x18] sm:$0xff]
          %v896 = vld [vmem:[#allocation8 + $0x20] sm:$0xff]
          %v897 = vld [vmem:[#allocation8 + $0x28] sm:$0xff]
          %v898 = vld [vmem:[#allocation8 + $0x30] sm:$0xff]
          %v899 = vld [vmem:[#allocation8 + $0x38] sm:$0xff]
          %v900 = vld [vmem:[#allocation8 + $0x40] sm:$0xff]
          %v901 = vld [vmem:[#allocation8 + $0x48] sm:$0xff]
          %v902 = vld [vmem:[#allocation8 + $0x50] sm:$0xff]
          %v903 = vld [vmem:[#allocation8 + $0x58] sm:$0xff]
          %v904 = vld [vmem:[#allocation8 + $0x60] sm:$0xff]
          %v905 = vld [vmem:[#allocation8 + $0x68] sm:$0xff]
          %v906 = vld [vmem:[#allocation8 + $0x70] sm:$0xff]
          %v907 = vld [vmem:[#allocation8 + $0x78] sm:$0xff]
          %v908 = vld [vmem:[%s6] sm:$0x1]
          %v910 = vlaneseq
          %v911 = vshrl.u32 %v910, 7
          %v912 = vsub.s32 0, %v911
          %v913 = vrot.slane %v908, %v912
          %915 = vmatprep.subr.mxu0 0.0
          %916 = vmatpush1.msra.mxu0 %v892
          %917 = vmatprep.subr.mxu0 0.0
          %918 = vmatpush1.msra.mxu0 %v893
          %919 = vmatprep.subr.mxu0 0.0
          %920 = vmatpush1.msra.mxu0 %v894
          %921 = vmatprep.subr.mxu0 0.0
          %922 = vmatpush1.msra.mxu0 %v895
          %923 = vmatprep.subr.mxu0 0.0
          %924 = vmatpush1.msra.mxu0 %v896
          %925 = vmatprep.subr.mxu0 0.0
          %926 = vmatpush1.msra.mxu0 %v897
          %927 = vmatprep.subr.mxu0 0.0
          %928 = vmatpush1.msra.mxu0 %v898
          %929 = vmatprep.subr.mxu0 0.0
          %930 = vmatpush1.msra.mxu0 %v899
          %931 = vmatprep.subr.mxu0 0.0
          %932 = vmatpush1.msra.mxu0 %v900
          %933 = vmatprep.subr.mxu0 0.0
          %934 = vmatpush1.msra.mxu0 %v901
          %935 = vmatprep.subr.mxu0 0.0
          %936 = vmatpush1.msra.mxu0 %v902
          %937 = vmatprep.subr.mxu0 0.0
          %938 = vmatpush1.msra.mxu0 %v903
          %939 = vmatprep.subr.mxu0 0.0
          %940 = vmatpush1.msra.mxu0 %v904
          %941 = vmatprep.subr.mxu0 0.0
          %942 = vmatpush1.msra.mxu0 %v905
          %943 = vmatprep.subr.mxu0 0.0
          %944 = vmatpush1.msra.mxu0 %v906
          %945 = vmatprep.subr.mxu0 0.0
          %946 = vmatpush1.msra.mxu0 %v907
          %947 = vmatprep.subr.mxu0 0.0
          %948 = vmatpush1.msra.mxu0 0.0
          %949 = vmatprep.subr.mxu0 0.0
          %950 = vmatpush1.msra.mxu0 0.0
          %951 = vmatprep.subr.mxu0 0.0
          %952 = vmatpush1.msra.mxu0 0.0
          %953 = vmatprep.subr.mxu0 0.0
          %954 = vmatpush1.msra.mxu0 0.0
          %955 = vmatprep.subr.mxu0 0.0
          %956 = vmatpush1.msra.mxu0 0.0
          %957 = vmatprep.subr.mxu0 0.0
          %958 = vmatpush1.msra.mxu0 0.0
          %959 = vmatprep.subr.mxu0 0.0
          %960 = vmatpush1.msra.mxu0 0.0
          %961 = vmatprep.subr.mxu0 0.0
          %962 = vmatpush1.msra.mxu0 0.0
          %963 = vmatprep.subr.mxu0 0.0
          %964 = vmatpush1.msra.mxu0 0.0
          %965 = vmatprep.subr.mxu0 0.0
          %966 = vmatpush1.msra.mxu0 0.0
          %967 = vmatprep.subr.mxu0 0.0
          %968 = vmatpush1.msra.mxu0 0.0
          %969 = vmatprep.subr.mxu0 0.0
          %970 = vmatpush1.msra.mxu0 0.0
          %971 = vmatprep.subr.mxu0 0.0
          %972 = vmatpush1.msra.mxu0 0.0
          %973 = vmatprep.subr.mxu0 0.0
          %974 = vmatpush1.msra.mxu0 0.0
          %975 = vmatprep.subr.mxu0 0.0
          %976 = vmatpush1.msra.mxu0 0.0
          %977 = vmatprep.subr.mxu0 0.0
          %978 = vmatpush1.msra.mxu0 0.0
          %979 = vmatprep.mubr.f32.mxu0 0.0
          %980 = vmatmul.mubr.f32.gmra.mrb[0].mxu0 %v891
          %v981 = vpop.f32.mrb[0].mxu0
          %v982 = vadd.f32 %v913, %v981
          %v983 = vpop.f32.mrb[0].mxu0
          %984 = vdwg.mxu0
          %v985 = vmax.f32 %v982, 0.0
          %v986 = vld [vmem:[#allocation9] sm:$0xff]
          %v987 = vld [vmem:[#allocation9 + $0x8] sm:$0xff]
          %v988 = vld [vmem:[#allocation9 + $0x10] sm:$0xff]
          %v989 = vld [vmem:[#allocation9 + $0x18] sm:$0xff]
          %v990 = vld [vmem:[#allocation9 + $0x20] sm:$0xff]
          %v991 = vld [vmem:[#allocation9 + $0x28] sm:$0xff]
          %v992 = vld [vmem:[#allocation9 + $0x30] sm:$0xff]
          %v993 = vld [vmem:[#allocation9 + $0x38] sm:$0xff]
          %v994 = vld [vmem:[#allocation9 + $0x40] sm:$0xff]
          %v995 = vld [vmem:[#allocation9 + $0x48] sm:$0xff]
          %v996 = vld [vmem:[#allocation9 + $0x50] sm:$0xff]
          %v997 = vld [vmem:[#allocation9 + $0x58] sm:$0xff]
          %v998 = vld [vmem:[#allocation9 + $0x60] sm:$0xff]
          %v999 = vld [vmem:[#allocation9 + $0x68] sm:$0xff]
          %v1000 = vld [vmem:[#allocation9 + $0x70] sm:$0xff]
          %v1001 = vld [vmem:[#allocation9 + $0x78] sm:$0xff]
          %v1002 = vld [vmem:[%s8] sm:$0x1]
          %v1004 = vlaneseq
          %v1005 = vshrl.u32 %v1004, 7
          %v1006 = vsub.s32 0, %v1005
          %v1007 = vrot.slane %v1002, %v1006
          %1009 = vmatprep.subr.mxu0 0.0
          %1010 = vmatpush1.msra.mxu0 %v986
          %1011 = vmatprep.subr.mxu0 0.0
          %1012 = vmatpush1.msra.mxu0 %v987
          %1013 = vmatprep.subr.mxu0 0.0
          %1014 = vmatpush1.msra.mxu0 %v988
          %1015 = vmatprep.subr.mxu0 0.0
          %1016 = vmatpush1.msra.mxu0 %v989
          %1017 = vmatprep.subr.mxu0 0.0
          %1018 = vmatpush1.msra.mxu0 %v990
          %1019 = vmatprep.subr.mxu0 0.0
          %1020 = vmatpush1.msra.mxu0 %v991
          %1021 = vmatprep.subr.mxu0 0.0
          %1022 = vmatpush1.msra.mxu0 %v992
          %1023 = vmatprep.subr.mxu0 0.0
          %1024 = vmatpush1.msra.mxu0 %v993
          %1025 = vmatprep.subr.mxu0 0.0
          %1026 = vmatpush1.msra.mxu0 %v994
          %1027 = vmatprep.subr.mxu0 0.0
          %1028 = vmatpush1.msra.mxu0 %v995
          %1029 = vmatprep.subr.mxu0 0.0
          %1030 = vmatpush1.msra.mxu0 %v996
          %1031 = vmatprep.subr.mxu0 0.0
          %1032 = vmatpush1.msra.mxu0 %v997
          %1033 = vmatprep.subr.mxu0 0.0
          %1034 = vmatpush1.msra.mxu0 %v998
          %1035 = vmatprep.subr.mxu0 0.0
          %1036 = vmatpush1.msra.mxu0 %v999
          %1037 = vmatprep.subr.mxu0 0.0
          %1038 = vmatpush1.msra.mxu0 %v1000
          %1039 = vmatprep.subr.mxu0 0.0
          %1040 = vmatpush1.msra.mxu0 %v1001
          %1041 = vmatprep.subr.mxu0 0.0
          %1042 = vmatpush1.msra.mxu0 0.0
          %1043 = vmatprep.subr.mxu0 0.0
          %1044 = vmatpush1.msra.mxu0 0.0
          %1045 = vmatprep.subr.mxu0 0.0
          %1046 = vmatpush1.msra.mxu0 0.0
          %1047 = vmatprep.subr.mxu0 0.0
          %1048 = vmatpush1.msra.mxu0 0.0
          %1049 = vmatprep.subr.mxu0 0.0
          %1050 = vmatpush1.msra.mxu0 0.0
          %1051 = vmatprep.subr.mxu0 0.0
          %1052 = vmatpush1.msra.mxu0 0.0
          %1053 = vmatprep.subr.mxu0 0.0
          %1054 = vmatpush1.msra.mxu0 0.0
          %1055 = vmatprep.subr.mxu0 0.0
          %1056 = vmatpush1.msra.mxu0 0.0
          %1057 = vmatprep.subr.mxu0 0.0
          %1058 = vmatpush1.msra.mxu0 0.0
          %1059 = vmatprep.subr.mxu0 0.0
          %1060 = vmatpush1.msra.mxu0 0.0
          %1061 = vmatprep.subr.mxu0 0.0
          %1062 = vmatpush1.msra.mxu0 0.0
          %1063 = vmatprep.subr.mxu0 0.0
          %1064 = vmatpush1.msra.mxu0 0.0
          %1065 = vmatprep.subr.mxu0 0.0
          %1066 = vmatpush1.msra.mxu0 0.0
          %1067 = vmatprep.subr.mxu0 0.0
          %1068 = vmatpush1.msra.mxu0 0.0
          %1069 = vmatprep.subr.mxu0 0.0
          %1070 = vmatpush1.msra.mxu0 0.0
          %1071 = vmatprep.subr.mxu0 0.0
          %1072 = vmatpush1.msra.mxu0 0.0
          %1073 = vmatprep.mubr.f32.mxu0 0.0
          %1074 = vmatmul.mubr.f32.gmra.mrb[0].mxu0 %v985
          %v1075 = vpop.f32.mrb[0].mxu0
          %v1076 = vadd.f32 %v1007, %v1075
          %v1077 = vpop.f32.mrb[0].mxu0
          %1078 = vdwg.mxu0
          %v1079 = vmax.f32 %v1076, 0.0
          %v1080 = vld [vmem:[#allocation11] sm:$0xff]
          %v1081 = vld [vmem:[#allocation11 + $0x8] sm:$0xff]
          %v1082 = vld [vmem:[#allocation11 + $0x10] sm:$0xff]
          %v1083 = vld [vmem:[#allocation11 + $0x18] sm:$0xff]
          %v1084 = vld [vmem:[#allocation11 + $0x20] sm:$0xff]
          %v1085 = vld [vmem:[#allocation11 + $0x28] sm:$0xff]
          %v1086 = vld [vmem:[#allocation11 + $0x30] sm:$0xff]
          %v1087 = vld [vmem:[#allocation11 + $0x38] sm:$0xff]
          %v1088 = vld [vmem:[#allocation11 + $0x40] sm:$0xff]
          %v1089 = vld [vmem:[#allocation11 + $0x48] sm:$0xff]
          %v1090 = vld [vmem:[#allocation11 + $0x50] sm:$0xff]
          %v1091 = vld [vmem:[#allocation11 + $0x58] sm:$0xff]
          %v1092 = vld [vmem:[#allocation11 + $0x60] sm:$0xff]
          %v1093 = vld [vmem:[#allocation11 + $0x68] sm:$0xff]
          %v1094 = vld [vmem:[#allocation11 + $0x70] sm:$0xff]
          %v1095 = vld [vmem:[#allocation11 + $0x78] sm:$0xff]
          %v1096 = vld [vmem:[%s10] sm:$0x1]
          %v1098 = vlaneseq
          %v1099 = vshrl.u32 %v1098, 7
          %v1100 = vsub.s32 0, %v1099
          %v1101 = vrot.slane %v1096, %v1100
          %1103 = vmatprep.subr.mxu0 0.0
          %1104 = vmatpush1.msra.mxu0 %v1080
          %1105 = vmatprep.subr.mxu0 0.0
          %1106 = vmatpush1.msra.mxu0 %v1081
          %1107 = vmatprep.subr.mxu0 0.0
          %1108 = vmatpush1.msra.mxu0 %v1082
          %1109 = vmatprep.subr.mxu0 0.0
          %1110 = vmatpush1.msra.mxu0 %v1083
          %1111 = vmatprep.subr.mxu0 0.0
          %1112 = vmatpush1.msra.mxu0 %v1084
          %1113 = vmatprep.subr.mxu0 0.0
          %1114 = vmatpush1.msra.mxu0 %v1085
          %1115 = vmatprep.subr.mxu0 0.0
          %1116 = vmatpush1.msra.mxu0 %v1086
          %1117 = vmatprep.subr.mxu0 0.0
          %1118 = vmatpush1.msra.mxu0 %v1087
          %1119 = vmatprep.subr.mxu0 0.0
          %1120 = vmatpush1.msra.mxu0 %v1088
          %1121 = vmatprep.subr.mxu0 0.0
          %1122 = vmatpush1.msra.mxu0 %v1089
          %1123 = vmatprep.subr.mxu0 0.0
          %1124 = vmatpush1.msra.mxu0 %v1090
          %1125 = vmatprep.subr.mxu0 0.0
          %1126 = vmatpush1.msra.mxu0 %v1091
          %1127 = vmatprep.subr.mxu0 0.0
          %1128 = vmatpush1.msra.mxu0 %v1092
          %1129 = vmatprep.subr.mxu0 0.0
          %1130 = vmatpush1.msra.mxu0 %v1093
          %1131 = vmatprep.subr.mxu0 0.0
          %1132 = vmatpush1.msra.mxu0 %v1094
          %1133 = vmatprep.subr.mxu0 0.0
          %1134 = vmatpush1.msra.mxu0 %v1095
          %1135 = vmatprep.subr.mxu0 0.0
          %1136 = vmatpush1.msra.mxu0 0.0
          %1137 = vmatprep.subr.mxu0 0.0
          %1138 = vmatpush1.msra.mxu0 0.0
          %1139 = vmatprep.subr.mxu0 0.0
          %1140 = vmatpush1.msra.mxu0 0.0
          %1141 = vmatprep.subr.mxu0 0.0
          %1142 = vmatpush1.msra.mxu0 0.0
          %1143 = vmatprep.subr.mxu0 0.0
          %1144 = vmatpush1.msra.mxu0 0.0
          %1145 = vmatprep.subr.mxu0 0.0
          %1146 = vmatpush1.msra.mxu0 0.0
          %1147 = vmatprep.subr.mxu0 0.0
          %1148 = vmatpush1.msra.mxu0 0.0
          %1149 = vmatprep.subr.mxu0 0.0
          %1150 = vmatpush1.msra.mxu0 0.0
          %1151 = vmatprep.subr.mxu0 0.0
          %1152 = vmatpush1.msra.mxu0 0.0
          %1153 = vmatprep.subr.mxu0 0.0
          %1154 = vmatpush1.msra.mxu0 0.0
          %1155 = vmatprep.subr.mxu0 0.0
          %1156 = vmatpush1.msra.mxu0 0.0
          %1157 = vmatprep.subr.mxu0 0.0
          %1158 = vmatpush1.msra.mxu0 0.0
          %1159 = vmatprep.subr.mxu0 0.0
          %1160 = vmatpush1.msra.mxu0 0.0
          %1161 = vmatprep.subr.mxu0 0.0
          %1162 = vmatpush1.msra.mxu0 0.0
          %1163 = vmatprep.subr.mxu0 0.0
          %1164 = vmatpush1.msra.mxu0 0.0
          %1165 = vmatprep.subr.mxu0 0.0
          %1166 = vmatpush1.msra.mxu0 0.0
          %1167 = vmatprep.mubr.f32.mxu0 0.0
          %1168 = vmatmul.mubr.f32.gmra.mrb[0].mxu0 %v1079
          %v1169 = vpop.f32.mrb[0].mxu0
          %v1170 = vadd.f32 %v1101, %v1169
          %v1171 = vpop.f32.mrb[0].mxu0
          %1172 = vdwg.mxu0
          %1173 = vst [vmem:[%s513] sm:$0xff] %v1170
        $region92: #{tpu_custom_call.1} parent=63 // pred_fallthru
          _
        %s1174 = sand.u32 %s301, 1
        %s1175 = scalar_lea.sflag [#allocation5], %s1174
        %s1176 = sand.u32 %s301, 1
        %s1177 = smul.addr %s1176, 8
        %s1178 = scalar_lea.vmem [#allocation12], %s1177
        // Predicated region
        $region93: #{tpu_custom_call.1} parent=63 // pred_check
          %p1179 = pneg %p311
        $region94: #{tpu_custom_call.1} parent=63 // pred_check_branch
          %1181 = sbr.rel (%p1179) target = $region96
        $region95: #{tpu_custom_call.1} parent=63 // pred_region
          %s1183 = ssub.s32 128, 128
          %1184 = vsyncadd %s1175, %s1183
          %s1185 = smul.addr %s34, 128
          %s1186 = scalar_lea.hbm %s11, %s1185
          %s1188 = sshll.u32 %s1178, 4
          %s1189 = int_to_ptr.vmem [resolvable:$true] %s1188
          %1191 = dma.vmem_to_hbm [thread:$0]  %s1189, 128, %s1186, %s1175
        $region96: #{tpu_custom_call.1} parent=63 // pred_fallthru
          _
      $region64: #{tpu_custom_call.1} parent=5 // pred_fallthru
        _
      %p1192 = scmp.le.s32.totalorder 2, %s25
      // Predicated region
      $region97: #{tpu_custom_call.1} parent=5 // pred_check
        %p1193 = pneg %p1192
      $region98: #{tpu_custom_call.1} parent=5 // pred_check_branch
        %1195 = sbr.rel (%p1193) target = $region100
      $region99: #{tpu_custom_call.1} parent=5 // pred_region
        %s1196 = ssub.s32 %s25, 2
        // Predicated region
        $region101: #{tpu_custom_call.1} parent=99 // pred_check
          %p1197 = pneg %p317
        $region102: #{tpu_custom_call.1} parent=99 // pred_check_branch
          %1199 = sbr.rel (%p1197) target = $region104
        $region103: #{tpu_custom_call.1} parent=99 // pred_region
          %s1200 = sand.u32 %s302, 1
          %s1201 = scalar_lea.sflag [#allocation5], %s1200
          %s1202 = sand.u32 %s302, 1
          %s1203 = smul.addr %s1202, 8
          %s1204 = scalar_lea.vmem [#allocation12], %s1203
          %1205 = dma.done %s1201, 128
        $region104: #{tpu_custom_call.1} parent=99 // pred_fallthru
          _
      $region100: #{tpu_custom_call.1} parent=5 // pred_fallthru
        _
    $region6: #{tpu_custom_call.1} parent=1 // loop_footer
      %s29 = sadd.s32 1, %s25
    $region7: #{tpu_custom_call.1} parent=1 // loop_footer_branch
      %24 = sbr.rel target = $region3
    $region8: #{tpu_custom_call.1} parent=1 // loop_exit
      _
    %1206 = vsyncpa [#allocation4], 1
    %s1207 = scalar_lea.sflag [#allocation4], 1
    %1208 = vsyncpa %s1207, 1
    %1209 = vsyncpa [#allocation7], 1
    %s1210 = scalar_lea.sflag [#allocation7], 1
    %1211 = vsyncpa %s1210, 1
    %1212 = vsyncpa [#allocation10], 1
    %1213 = vsyncpa [#allocation5], 1
    %s1214 = scalar_lea.sflag [#allocation5], 1
    %1215 = vsyncpa %s1214, 1

</llo_original>
